<compile_context>
chip_gen: v7x
topology: tpu7x:2x2x1
jax: 0.10.0
libtpu: 0.0.40
codegen_flags: <defaults>
</compile_context>

<pallas_src>
import functools

import jax
import jax.numpy as jnp
from jax.experimental import pallas as pl
from jax.experimental.pallas import tpu as pltpu


def _vmem_limit_bytes():
    """Generation-aware scoped-VMEM limit: ~65% of capacity, capped at 96 MiB."""
    cap = 64 * 1024 * 1024  # conservative fallback (v7x physical per-core VMEM)
    try:
        info = pltpu.get_tpu_info()
        cap = int(getattr(info, "vmem_capacity_bytes", cap)) or cap
    except Exception:
        pass
    return min(int(cap * 0.65), 96 * 1024 * 1024)


_VMEM_LIMIT = _vmem_limit_bytes()


def _sublane_align(dtype):
    return {4: 8, 2: 16, 1: 32}.get(jnp.dtype(dtype).itemsize, 8)


def _pick_tile(dim, align, target):
    """Largest tile <= target that divides `dim` and is a multiple of `align`;
    falls back to the full dim (full-extent blocks are always legal)."""
    if dim <= target:
        return dim
    t = (target // align) * align
    while t >= align:
        if dim % t == 0:
            return t
        t -= align
    return dim


# ---------------------------------------------------------------------------
# Kernel 1: GroupNorm statistics only -> per-channel (scale, shift), N-tiled
# ---------------------------------------------------------------------------

def _gn_stats_kernel(x_ref, g_ref, b_ref, stats_ref, sum_ref, sq_ref, *,
                     num_groups, eps, n_total):
    t = pl.program_id(1)

    @pl.when(t == 0)
    def _():
        sum_ref[...] = jnp.zeros_like(sum_ref)
        sq_ref[...] = jnp.zeros_like(sq_ref)

    x = x_ref[0].astype(jnp.float32)                       # (C, tn) channel-major
    sum_ref[...] += jnp.sum(x, axis=-1, keepdims=True)     # (C, 1)
    sq_ref[...] += jnp.sum(x * x, axis=-1, keepdims=True)  # (C, 1)

    @pl.when(t == pl.num_programs(1) - 1)
    def _():
        C = sum_ref.shape[0]
        cg = C // num_groups
        cnt = jnp.float32(cg * n_total)
        s_g = jnp.sum(sum_ref[...].reshape(num_groups, cg, 1), axis=1, keepdims=True)
        q_g = jnp.sum(sq_ref[...].reshape(num_groups, cg, 1), axis=1, keepdims=True)
        mean = s_g / cnt                                   # (G, 1, 1)
        var = q_g / cnt - mean * mean
        inv = jax.lax.rsqrt(var + eps)                     # (G, 1, 1)
        gamma = g_ref[...].astype(jnp.float32).reshape(num_groups, cg, 1)
        beta = b_ref[...].astype(jnp.float32).reshape(num_groups, cg, 1)
        scale = gamma * inv                                # (G, cg, 1)
        shift = beta - mean * scale
        stats_ref[0, :, 0:1] = scale.reshape(C, 1)
        stats_ref[0, :, 1:2] = shift.reshape(C, 1)


def groupnorm_stats(x_cm, gamma, beta, num_groups, eps):
    B, C, N = x_cm.shape
    tn = _pick_tile(N, 128, 2048)
    kernel = functools.partial(_gn_stats_kernel, num_groups=num_groups,
                               eps=eps, n_total=N)
    return pl.pallas_call(
        kernel,
        out_shape=jax.ShapeDtypeStruct((B, C, 2), jnp.float32),
        grid_spec=pltpu.PrefetchScalarGridSpec(
            num_scalar_prefetch=0,
            grid=(B, N // tn),
            in_specs=[
                pl.BlockSpec((1, C, tn), lambda b, t: (b, 0, t)),
                pl.BlockSpec((C, 1), lambda b, t: (0, 0)),
                pl.BlockSpec((C, 1), lambda b, t: (0, 0)),
            ],
            out_specs=pl.BlockSpec((1, C, 2), lambda b, t: (b, 0, 0)),
            scratch_shapes=[pltpu.VMEM((C, 1), jnp.float32),
                            pltpu.VMEM((C, 1), jnp.float32)],
        ),
        compiler_params=pltpu.CompilerParams(
            dimension_semantics=("parallel", "arbitrary"),
            vmem_limit_bytes=_VMEM_LIMIT,
        ),
    )(x_cm, gamma.reshape(C, 1), beta.reshape(C, 1))


# ---------------------------------------------------------------------------
# Kernel 2: fused GroupNorm-apply + QKV projection (full-K, resident weight)
# ---------------------------------------------------------------------------

def _gn_qkv_kernel(x_ref, stats_ref, w_ref, b_ref, q_ref, k_ref, v_ref):
    x = x_ref[0].astype(jnp.float32)                        # (C, tt) channel-major
    st = stats_ref[0]                                       # (C, 2) f32
    h = (x * st[:, 0:1] + st[:, 1:2]).astype(w_ref.dtype)   # normalize+affine -> bf16
    # (tt, 3C) = h^T @ W_qkv via TN dimension numbers (per-tile transpose under MXU)
    y = jax.lax.dot_general(h, w_ref[...], (((0,), (0,)), ((), ())),
                            preferred_element_type=jnp.float32)
    y = y + b_ref[...].astype(jnp.float32)
    c = q_ref.shape[-1]
    q_ref[0] = y[:, :c].astype(q_ref.dtype)
    k_ref[0] = y[:, c:2 * c].astype(k_ref.dtype)
    v_ref[0] = y[:, 2 * c:].astype(v_ref.dtype)


def gn_qkv_projection(x_cm, stats, w_qkv, b_qkv, compute_dtype):
    B, C, N = x_cm.shape
    C3 = w_qkv.shape[1]
    tt_target = 512 if B > 1 else max(128, min(512, N // 2))
    tt = _pick_tile(N, 128, tt_target)   # lane dim of the x block -> 128-aligned
    outs = pl.pallas_call(
        _gn_qkv_kernel,
        out_shape=[jax.ShapeDtypeStruct((B, N, C), compute_dtype)] * 3,
        grid_spec=pltpu.PrefetchScalarGridSpec(
            num_scalar_prefetch=0,
            grid=(B, N // tt),
            in_specs=[
                pl.BlockSpec((1, C, tt), lambda b, i: (b, 0, i)),
                pl.BlockSpec((1, C, 2), lambda b, i: (b, 0, 0)),
                pl.BlockSpec((C, C3), lambda b, i: (0, 0)),   # constant index -> resident
                pl.BlockSpec((1, C3), lambda b, i: (0, 0)),
            ],
            out_specs=[
                pl.BlockSpec((1, tt, C), lambda b, i: (b, i, 0)),
                pl.BlockSpec((1, tt, C), lambda b, i: (b, i, 0)),
                pl.BlockSpec((1, tt, C), lambda b, i: (b, i, 0)),
            ],
        ),
        compiler_params=pltpu.CompilerParams(
            dimension_semantics=("parallel", "parallel"),
            vmem_limit_bytes=_VMEM_LIMIT,
        ),
    )(x_cm, stats, w_qkv, b_qkv.reshape(1, C3))
    return outs[0], outs[1], outs[2]


# ---------------------------------------------------------------------------
# Kernel 3: flash-style single-head attention over spatial tokens
# ---------------------------------------------------------------------------

def _flash_attn_kernel(q_ref, k_ref, v_ref, o_ref, m_ref, l_ref, acc_ref):
    kv_step = pl.program_id(2)

    @pl.when(kv_step == 0)
    def _():
        m_ref[...] = jnp.full(m_ref.shape, -jnp.inf, jnp.float32)
        l_ref[...] = jnp.zeros_like(l_ref)
        acc_ref[...] = jnp.zeros_like(acc_ref)

    # softmax scale is pre-folded into W_q / b_q; no per-step multiply.
    s = jax.lax.dot_general(q_ref[0], k_ref[0], (((1,), (1,)), ((), ())),
                            preferred_element_type=jnp.float32)   # (tq, tkv) f32

    m_prev = m_ref[...]
    m_new = jnp.maximum(m_prev, jnp.max(s, axis=-1, keepdims=True))
    alpha = jnp.exp(m_prev - m_new)
    # TODO(synk): bf16 exp would relieve the EUP on v6e/v7x; kept f32 for accuracy.
    p = jnp.exp(s - m_new)
    l_ref[...] = alpha * l_ref[...] + jnp.sum(p, axis=-1, keepdims=True)
    acc_ref[...] = alpha * acc_ref[...] + jnp.dot(
        p.astype(v_ref.dtype), v_ref[0], preferred_element_type=jnp.float32)
    m_ref[...] = m_new

    @pl.when(kv_step == pl.num_programs(2) - 1)
    def _():
        inv_l = pl.reciprocal(l_ref[...], approx=True)
        o_ref[0] = (acc_ref[...] * inv_l).astype(o_ref.dtype)


def flash_attention(q, k, v):
    B, N, C = q.shape
    align = _sublane_align(q.dtype)
    tq_target = 1024 if B > 1 else max(align, min(1024, N // 2))
    tq = _pick_tile(N, align, tq_target)
    tkv = _pick_tile(N, align, 512)
    return pl.pallas_call(
        _flash_attn_kernel,
        out_shape=jax.ShapeDtypeStruct((B, N, C), q.dtype),
        grid_spec=pltpu.PrefetchScalarGridSpec(
            num_scalar_prefetch=0,
            grid=(B, N // tq, N // tkv),
            in_specs=[
                pl.BlockSpec((1, tq, C), lambda b, i, j: (b, i, 0)),
                pl.BlockSpec((1, tkv, C), lambda b, i, j: (b, j, 0)),
                pl.BlockSpec((1, tkv, C), lambda b, i, j: (b, j, 0)),
            ],
            out_specs=pl.BlockSpec((1, tq, C), lambda b, i, j: (b, i, 0)),
            scratch_shapes=[
                pltpu.VMEM((tq, 1), jnp.float32),    # running max
                pltpu.VMEM((tq, 1), jnp.float32),    # running denom
                pltpu.VMEM((tq, C), jnp.float32),    # output accumulator
            ],
        ),
        compiler_params=pltpu.CompilerParams(
            dimension_semantics=("parallel", "parallel", "arbitrary"),
            vmem_limit_bytes=_VMEM_LIMIT,
        ),
    )(q, k, v)


# ---------------------------------------------------------------------------
# Kernel 4: proj_out + bias + residual, written back channel-major (NCHW)
# ---------------------------------------------------------------------------

def _proj_residual_kernel(a_ref, w_ref, b_ref, x_ref, o_ref):
    # y[c_out, t] = sum_cin Wo[c_out, c_in] * attn[t, c_in]  (Wo stored (out, in))
    y = jax.lax.dot_general(
        w_ref[...], a_ref[0], (((1,), (1,)), ((), ())),
        preferred_element_type=jnp.float32)                  # (C, tt) f32
    y = y + b_ref[...].astype(jnp.float32)                   # (C, 1) broadcast
    o_ref[0] = (x_ref[0].astype(jnp.float32) + y).astype(o_ref.dtype)


def proj_out_residual(attn_tok, w_o, b_o, x_cm):
    B, N, C = attn_tok.shape
    tt_target = 512 if B > 1 else max(128, min(512, N // 2))
    tt = _pick_tile(N, 128, tt_target)   # lane dim of the channel-major output block
    return pl.pallas_call(
        _proj_residual_kernel,
        out_shape=jax.ShapeDtypeStruct((B, C, N), x_cm.dtype),
        grid_spec=pltpu.PrefetchScalarGridSpec(
            num_scalar_prefetch=0,
            grid=(B, N // tt),
            in_specs=[
                pl.BlockSpec((1, tt, C), lambda b, t: (b, t, 0)),
                pl.BlockSpec((C, C), lambda b, t: (0, 0)),    # resident W_o
                pl.BlockSpec((C, 1), lambda b, t: (0, 0)),
                pl.BlockSpec((1, C, tt), lambda b, t: (b, 0, t)),
            ],
            out_specs=pl.BlockSpec((1, C, tt), lambda b, t: (b, 0, t)),
        ),
        compiler_params=pltpu.CompilerParams(
            dimension_semantics=("parallel", "parallel"),
            vmem_limit_bytes=_VMEM_LIMIT,
        ),
    )(attn_tok, w_o, b_o.reshape(C, 1), x_cm)


# ---------------------------------------------------------------------------
# Module wrapper
# ---------------------------------------------------------------------------

class SpatialSelfAttentionPallas:
    def __init__(self, key, in_channels, param_dtype=jnp.float32,
                 compute_dtype=jnp.bfloat16):
        C = in_channels
        assert C % 32 == 0, "GroupNorm(32) requires in_channels % 32 == 0"
        self.C = C
        self.num_groups = 32
        self.eps = 1e-6
        self.scale = int(C) ** (-0.5)
        self.compute_dtype = compute_dtype

        keys = jax.random.split(key, 8)
        bound = 1.0 / (C ** 0.5)

        def u(k, shape):
            return jax.random.uniform(k, shape, param_dtype, -bound, bound)

        # GroupNorm affine (PyTorch defaults: weight=1, bias=0)
        self.gamma = jnp.ones((C,), param_dtype)
        self.beta = jnp.zeros((C,), param_dtype)
        # 1x1 convs; f32 (out, in) copies kept for the reference implementation
        self.w_q, self.b_q = u(keys[0], (C, C)), u(keys[1], (C,))
        self.w_k, self.b_k = u(keys[2], (C, C)), u(keys[3], (C,))
        self.w_v, self.b_v = u(keys[4], (C, C)), u(keys[5], (C,))
        self.w_o, self.b_o = u(keys[6], (C, C)), u(keys[7], (C,))

        # Fused QKV weight: pre-transposed to (in, 3*out) so the kernel contracts on
        # channels directly; softmax scale folded into the q columns / q bias.
        self.w_qkv = jnp.concatenate(
            [self.w_q.T * self.scale, self.w_k.T, self.w_v.T], axis=1
        ).astype(compute_dtype)
        self.b_qkv = jnp.concatenate(
            [self.b_q * self.scale, self.b_k, self.b_v]).astype(jnp.float32)
        # bf16 copy of the output projection for the MXU path
        self.w_o_c = self.w_o.astype(compute_dtype)

    def __call__(self, x):                       # x: (B, C, H, W)
        B, C, H, W = x.shape
        N = H * W
        x_cm = x.reshape(B, C, N)                                     # free reshape
        stats = groupnorm_stats(x_cm, self.gamma, self.beta,
                                self.num_groups, self.eps)            # (B, C, 2)
        q, k, v = gn_qkv_projection(x_cm, stats, self.w_qkv, self.b_qkv,
                                    self.compute_dtype)               # (B, N, C) bf16 x3
        attn = flash_attention(q, k, v)                               # (B, N, C) bf16
        y_cm = proj_out_residual(attn, self.w_o_c, self.b_o, x_cm)    # (B, C, N) f32
        return y_cm.reshape(B, C, H, W)


# ---------------------------------------------------------------------------
# Pure-JAX reference (high precision) for sanity check
# ---------------------------------------------------------------------------

def reference(mod, x):
    B, C, H, W = x.shape
    G = mod.num_groups
    hp = jax.lax.Precision.HIGHEST

    xf = x.astype(jnp.float32)
    xg = xf.reshape(B, G, C // G, H, W)
    mean = xg.mean(axis=(2, 3, 4), keepdims=True)
    var = ((xg - mean) ** 2).mean(axis=(2, 3, 4), keepdims=True)
    hn = ((xg - mean) * jax.lax.rsqrt(var + mod.eps)).reshape(B, C, H, W)
    hn = hn * mod.gamma[None, :, None, None] + mod.beta[None, :, None, None]

    def conv1x1(t, w, b):
        return jnp.einsum('bchw,oc->bohw', t, w, precision=hp) + b[None, :, None, None]

    q = conv1x1(hn, mod.w_q, mod.b_q)
    k = conv1x1(hn, mod.w_k, mod.b_k)
    v = conv1x1(hn, mod.w_v, mod.b_v)
    N = H * W
    qf = q.reshape(B, C, N).transpose(0, 2, 1)
    kf = k.reshape(B, C, N)
    w_ = jnp.einsum('bic,bcj->bij', qf, kf, precision=hp) * (int(C) ** (-0.5))
    w_ = jax.nn.softmax(w_, axis=2)
    vf = v.reshape(B, C, N)
    h_ = jnp.einsum('bcj,bij->bci', vf, w_, precision=hp).reshape(B, C, H, W)
    h_ = conv1x1(h_, mod.w_o, mod.b_o)
    return x + h_


# ---------------------------------------------------------------------------

if __name__ == "__main__":
    key = jax.random.PRNGKey(0)
    k_param, k_x = jax.random.split(key)

    B, C, H, W = 2, 256, 16, 16     # small, GroupNorm(32)-compatible, lane-aligned

    mod = SpatialSelfAttentionPallas(k_param, in_channels=C)
    x = jax.random.normal(k_x, (B, C, H, W), jnp.float32)

    out = jax.block_until_ready(mod(x))
    ref = reference(mod, x)

    assert out.shape == (B, C, H, W)
    max_err = float(jnp.max(jnp.abs(out - ref)))
    assert jnp.allclose(out, ref, atol=3e-2, rtol=3e-2), (
        f"mismatch vs reference (max abs err {max_err})")

    print("KERNEL_OK")
</pallas_src>

<mosaic_0001>
module attributes {stable_mosaic.version = 11 : i64} {
  func.func @_gn_stats_kernel(%arg0: i32, %arg1: i32, %arg2: memref<1x256x256xf32, #tpu.memory_space<vmem>>, %arg3: memref<256x1xf32, #tpu.memory_space<vmem>>, %arg4: memref<256x1xf32, #tpu.memory_space<vmem>>, %arg5: memref<1x256x2xf32, #tpu.memory_space<vmem>>, %arg6: memref<256x1xf32, #tpu.memory_space<vmem>>, %arg7: memref<256x1xf32, #tpu.memory_space<vmem>>) attributes {dimension_semantics = [#tpu.dimension_semantics<parallel>, #tpu.dimension_semantics<arbitrary>], iteration_bounds = array<i64: 2, 1>, scalar_prefetch = 0 : i64, scratch_operands = 2 : i64, tpu.core_type = #tpu.core_type<tc>, window_params = [{transform_indices = @transform_0, window_bounds = array<i64: 1, 256, 256>}, {pipeline_mode = #tpu.pipeline_mode<synchronous>, transform_indices = @transform_1, window_bounds = array<i64: 256, 1>}, {pipeline_mode = #tpu.pipeline_mode<synchronous>, transform_indices = @transform_2, window_bounds = array<i64: 256, 1>}, {transform_indices = @transform_3, window_bounds = array<i64: 1, 256, 2>}]} {
    %c0_i32 = arith.constant 0 : i32
    %0 = arith.cmpi eq, %arg1, %c0_i32 : i32
    %1 = arith.extui %0 : i1 to i32
    %c0_i32_0 = arith.constant 0 : i32
    %2 = arith.cmpi ne, %1, %c0_i32_0 : i32
    scf.if %2 {
      %cst_14 = arith.constant 0.000000e+00 : f32
      %19 = vector.broadcast %cst_14 : f32 to vector<256x1xf32>
      %c0_15 = arith.constant 0 : index
      %c0_16 = arith.constant 0 : index
      %20 = vector.load %arg6[%c0_15, %c0_16] : memref<256x1xf32, #tpu.memory_space<vmem>>, vector<256x1xf32>
      tpu.vector_store %arg6[%c0_15, %c0_16], %19 {strides = array<i32>} : memref<256x1xf32, #tpu.memory_space<vmem>>, vector<256x1xf32>,
      %cst_17 = arith.constant 0.000000e+00 : f32
      %21 = vector.broadcast %cst_17 : f32 to vector<256x1xf32>
      %c0_18 = arith.constant 0 : index
      %c0_19 = arith.constant 0 : index
      %22 = vector.load %arg7[%c0_18, %c0_19] : memref<256x1xf32, #tpu.memory_space<vmem>>, vector<256x1xf32>
      tpu.vector_store %arg7[%c0_18, %c0_19], %21 {strides = array<i32>} : memref<256x1xf32, #tpu.memory_space<vmem>>, vector<256x1xf32>,
    } else {
    }
    %c0 = arith.constant 0 : index
    %c0_1 = arith.constant 0 : index
    %c0_2 = arith.constant 0 : index
    %3 = vector.load %arg2[%c0, %c0_1, %c0_2] : memref<1x256x256xf32, #tpu.memory_space<vmem>>, vector<1x256x256xf32>
    %4 = vector.shape_cast %3 : vector<1x256x256xf32> to vector<256x256xf32>
    %c0_3 = arith.constant 0 : index
    %c0_4 = arith.constant 0 : index
    %5 = vector.load %arg6[%c0_3, %c0_4] : memref<256x1xf32, #tpu.memory_space<vmem>>, vector<256x1xf32>
    %cst = arith.constant dense<0.000000e+00> : vector<256xf32>
    %6 = vector.multi_reduction <add>, %4, %cst [1] : vector<256x256xf32> to vector<256xf32>
    %7 = vector.shape_cast %6 : vector<256xf32> to vector<256x1xf32>
    %8 = arith.addf %5, %7 : vector<256x1xf32>
    %c0_5 = arith.constant 0 : index
    %c0_6 = arith.constant 0 : index
    %9 = vector.load %arg6[%c0_5, %c0_6] : memref<256x1xf32, #tpu.memory_space<vmem>>, vector<256x1xf32>
    tpu.vector_store %arg6[%c0_5, %c0_6], %8 {strides = array<i32>} : memref<256x1xf32, #tpu.memory_space<vmem>>, vector<256x1xf32>,
    %c0_7 = arith.constant 0 : index
    %c0_8 = arith.constant 0 : index
    %10 = vector.load %arg7[%c0_7, %c0_8] : memref<256x1xf32, #tpu.memory_space<vmem>>, vector<256x1xf32>
    %11 = arith.mulf %4, %4 : vector<256x256xf32>
    %cst_9 = arith.constant dense<0.000000e+00> : vector<256xf32>
    %12 = vector.multi_reduction <add>, %11, %cst_9 [1] : vector<256x256xf32> to vector<256xf32>
    %13 = vector.shape_cast %12 : vector<256xf32> to vector<256x1xf32>
    %14 = arith.addf %10, %13 : vector<256x1xf32>
    %c0_10 = arith.constant 0 : index
    %c0_11 = arith.constant 0 : index
    %15 = vector.load %arg7[%c0_10, %c0_11] : memref<256x1xf32, #tpu.memory_space<vmem>>, vector<256x1xf32>
    tpu.vector_store %arg7[%c0_10, %c0_11], %14 {strides = array<i32>} : memref<256x1xf32, #tpu.memory_space<vmem>>, vector<256x1xf32>,
    %c0_i32_12 = arith.constant 0 : i32
    %16 = arith.cmpi eq, %arg1, %c0_i32_12 : i32
    %17 = arith.extui %16 : i1 to i32
    %c0_i32_13 = arith.constant 0 : i32
    %18 = arith.cmpi ne, %17, %c0_i32_13 : i32
    scf.if %18 {
      %c0_14 = arith.constant 0 : index
      %c0_15 = arith.constant 0 : index
      %19 = vector.load %arg6[%c0_14, %c0_15] : memref<256x1xf32, #tpu.memory_space<vmem>>, vector<256x1xf32>
      %20 = vector.shape_cast %19 : vector<256x1xf32> to vector<32x8x1xf32>
      %cst_16 = arith.constant dense<0.000000e+00> : vector<32x1xf32>
      %21 = vector.multi_reduction <add>, %20, %cst_16 [1] : vector<32x8x1xf32> to vector<32x1xf32>
      %22 = vector.shape_cast %21 : vector<32x1xf32> to vector<32x1x1xf32>
      %c0_17 = arith.constant 0 : index
      %c0_18 = arith.constant 0 : index
      %23 = vector.load %arg7[%c0_17, %c0_18] : memref<256x1xf32, #tpu.memory_space<vmem>>, vector<256x1xf32>
      %24 = vector.shape_cast %23 : vector<256x1xf32> to vector<32x8x1xf32>
      %cst_19 = arith.constant dense<0.000000e+00> : vector<32x1xf32>
      %25 = vector.multi_reduction <add>, %24, %cst_19 [1] : vector<32x8x1xf32> to vector<32x1xf32>
      %26 = vector.shape_cast %25 : vector<32x1xf32> to vector<32x1x1xf32>
      %cst_20 = arith.constant 2.048000e+03 : f32
      %27 = vector.broadcast %cst_20 : f32 to vector<32x1x1xf32>
      %28 = arith.divf %22, %27 : vector<32x1x1xf32>
      %cst_21 = arith.constant 2.048000e+03 : f32
      %29 = vector.broadcast %cst_21 : f32 to vector<32x1x1xf32>
      %30 = arith.divf %26, %29 : vector<32x1x1xf32>
      %31 = arith.mulf %28, %28 : vector<32x1x1xf32>
      %32 = arith.subf %30, %31 : vector<32x1x1xf32>
      %cst_22 = arith.constant 9.99999997E-7 : f32
      %33 = vector.broadcast %cst_22 : f32 to vector<32x1x1xf32>
      %34 = arith.addf %32, %33 : vector<32x1x1xf32>
      %35 = math.rsqrt %34 : vector<32x1x1xf32>
      %c0_23 = arith.constant 0 : index
      %c0_24 = arith.constant 0 : index
      %36 = vector.load %arg3[%c0_23, %c0_24] : memref<256x1xf32, #tpu.memory_space<vmem>>, vector<256x1xf32>
      %37 = vector.shape_cast %36 : vector<256x1xf32> to vector<32x8x1xf32>
      %c0_25 = arith.constant 0 : index
      %c0_26 = arith.constant 0 : index
      %38 = vector.load %arg4[%c0_25, %c0_26] : memref<256x1xf32, #tpu.memory_space<vmem>>, vector<256x1xf32>
      %39 = vector.shape_cast %38 : vector<256x1xf32> to vector<32x8x1xf32>
      %40 = vector.broadcast %35 : vector<32x1x1xf32> to vector<32x8x1xf32>
      %41 = arith.mulf %37, %40 : vector<32x8x1xf32>
      %42 = vector.broadcast %28 : vector<32x1x1xf32> to vector<32x8x1xf32>
      %43 = arith.mulf %42, %41 : vector<32x8x1xf32>
      %44 = arith.subf %39, %43 : vector<32x8x1xf32>
      %45 = vector.shape_cast %41 : vector<32x8x1xf32> to vector<256x1xf32>
      %c0_27 = arith.constant 0 : index
      %c0_28 = arith.constant 0 : index
      %c0_29 = arith.constant 0 : index
      %46 = vector.load %arg5[%c0_27, %c0_28, %c0_29] : memref<1x256x2xf32, #tpu.memory_space<vmem>>, vector<1x256x1xf32>
      %47 = vector.shape_cast %46 : vector<1x256x1xf32> to vector<256x1xf32>
      %48 = vector.shape_cast %45 : vector<256x1xf32> to vector<1x256x1xf32>
      tpu.vector_store %arg5[%c0_27, %c0_28, %c0_29], %48 {strides = array<i32>} : memref<1x256x2xf32, #tpu.memory_space<vmem>>, vector<1x256x1xf32>,
      %49 = vector.shape_cast %44 : vector<32x8x1xf32> to vector<256x1xf32>
      %c0_30 = arith.constant 0 : index
      %c0_31 = arith.constant 0 : index
      %c1 = arith.constant 1 : index
      %50 = vector.load %arg5[%c0_30, %c0_31, %c1] : memref<1x256x2xf32, #tpu.memory_space<vmem>>, vector<1x256x1xf32>
      %51 = vector.shape_cast %50 : vector<1x256x1xf32> to vector<256x1xf32>
      %52 = vector.shape_cast %49 : vector<256x1xf32> to vector<1x256x1xf32>
      tpu.vector_store %arg5[%c0_30, %c0_31, %c1], %52 {strides = array<i32>} : memref<1x256x2xf32, #tpu.memory_space<vmem>>, vector<1x256x1xf32>,
    } else {
    }
    return
  }
  func.func @transform_0(%arg0: i32, %arg1: i32) -> (i32, i32, i32) {
    %c0_i32 = arith.constant 0 : i32
    %c0_i32_0 = arith.constant 0 : i32
    return %arg0, %c0_i32, %arg1 : i32, i32, i32
  }
  func.func @transform_1(%arg0: i32, %arg1: i32) -> (i32, i32) {
    %c0_i32 = arith.constant 0 : i32
    %c0_i32_0 = arith.constant 0 : i32
    %c0_i32_1 = arith.constant 0 : i32
    return %c0_i32, %c0_i32_0 : i32, i32
  }
  func.func @transform_2(%arg0: i32, %arg1: i32) -> (i32, i32) {
    %c0_i32 = arith.constant 0 : i32
    %c0_i32_0 = arith.constant 0 : i32
    %c0_i32_1 = arith.constant 0 : i32
    return %c0_i32, %c0_i32_0 : i32, i32
  }
  func.func @transform_3(%arg0: i32, %arg1: i32) -> (i32, i32, i32) {
    %c0_i32 = arith.constant 0 : i32
    %c0_i32_0 = arith.constant 0 : i32
    %c0_i32_1 = arith.constant 0 : i32
    return %arg0, %c0_i32, %c0_i32_0 : i32, i32, i32
  }
}

</mosaic_0001>

<llo_original>
// kernel: tpu_custom_call.1
$region0: #{tpu_custom_call.1}
  #allocation0 [shape = 'u32[]', space=smem, size = 0x4, offset = 0x4, fixed_abs, tag = 'smem constant byte address 0x4 - core index']
  #allocation1 [shape = 'u32[144,128]{1,0:T(1,128)}', space=vmem, size = 0x12000, scoped, tag = 'internal scratch']
  #allocation2 [shape = 'f32[256,1]{1,0:T(8,128)}', space=vmem, size = 0x20000, scoped, tag = 'scratch operand']
  #allocation3 [shape = 'f32[256,1]{1,0:T(8,128)}', space=vmem, size = 0x20000, scoped, tag = 'scratch operand']
  %s0 = inlined_call_operand.hbm [shape: f32[2,256,256], index: 0, kind: input, shape index: {}]
  %s1 = inlined_call_operand.vmem [shape: f32[256,1], index: 1, kind: input, shape index: {}]
  %s2 = inlined_call_operand.vmem [shape: f32[256,1], index: 2, kind: input, shape index: {}]
  %s3 = inlined_call_operand.vmem [shape: f32[2,256,2], index: 3, kind: output, shape index: {}]
  %s4 = sld [smem:[#allocation0]]
  $region57: #{tpu_custom_call.1} parent=0
    _
  %s6 = ssub.s32 1, %s4
  %s7 = scalar_select 0, %s6, %s4
  $region1: #{tpu_custom_call.1} parent=0
    #allocation4 [shape = 'u8[524288]{0}', space=vmem, size = 0x80000, scoped, tag = 'input window, operand 0']
    #allocation5 [shape = 's32[2]{0}', space=sflag, size = 0x8, scoped, tag = 'scoped memory for tpu_custom_call.1']
    %8 = vsyncpa [#allocation5], 0
    %s9 = scalar_lea.sflag [#allocation5], 1
    %10 = vsyncpa %s9, 0
    loop: start=0, step=1, limit=4
    $region2: #{tpu_custom_call.1} parent=1 // loop_pre_header
      _
    $region3: #{tpu_custom_call.1} parent=1 // loop_header
      %s12 = sphi 0, %s16
      %p13 = scmp.ge.s32.totalorder %s12, 4
      %s19 = sphi 0, %s31
      %s20 = sphi 0, %s27
      %s21 = sphi 0, %s19
      %s22 = sphi 0, %s20
      %s23 = sphi 0, %s21
      %s24 = sphi 0, %s22
      %s36 = sphi 0, %s38
      %s39 = sphi 0, %s36
      %s40 = sphi 0, %s39
      %s56 = sphi 0, %s40
      %s60 = sphi 0, %s60
      %s62 = sphi 0, %s60
      %s63 = sphi 0, %s62
      %s77 = sphi 0, %s63
      %s81 = sphi 0, %s81
      %s83 = sphi 0, %s81
      %s84 = sphi 0, %s83
      %s98 = sphi 0, %s84
      %s104 = sphi 0, %s106
      %s107 = sphi 0, %s104
      %s108 = sphi 0, %s107
      %s124 = sphi 0, %s108
    $region4: #{tpu_custom_call.1} parent=1 // loop_header_branch
      %15 = sbr.rel (%p13) target = $region8
    $region5: #{tpu_custom_call.1} parent=1 // loop_body
      %s17 = ssub.s32 %s12, 1
      %s18 = ssub.s32 %s12, 2
      %s25 = sadd.s32 1, %s20
      %p26 = scmp.ge.s32.totalorder %s25, 1
      %s27 = scalar_select %p26, 0, %s25
      %s28 = sadd.s32 1, %s19
      %s29 = scalar_select %p26, %s28, %s19
      %p30 = scmp.ge.s32.totalorder %s29, 2
      %s31 = scalar_select %p30, 0, %s29
      %s32 = ssub.s32 %s19, %s31
      %s33 = ssub.s32 %s20, %s27
      %s34 = sor.u32 %s32, %s33
      %p35 = scmp.eq.s32.totalorder %s34, 0
      %s37 = sadd.s32 %s36, 1
      %s38 = scalar_select %p35, %s36, %s37
      %p41 = pneg %p35
      %p42 = scmp.eq.s32.totalorder %s12, 1
      %p43 = por %p41, %p42
      %p44 = scmp.ne.s32.totalorder %s36, %s39
      %p45 = scmp.eq.s32.totalorder %s12, 0
      %p46 = por %p44, %p45
      %p47 = scmp.ne.s32.totalorder %s36, %s39
      %p48 = scmp.eq.s32.totalorder %s17, 1
      %p49 = por %p47, %p48
      %p50 = scmp.ne.s32.totalorder %s39, %s40
      %p51 = scmp.eq.s32.totalorder %s17, 0
      %p52 = por %p50, %p51
      %p53 = scmp.ne.s32.totalorder %s39, %s40
      %p54 = scmp.eq.s32.totalorder %s18, 1
      %p55 = por %p53, %p54
      %p57 = scmp.ne.s32.totalorder %s40, %s56
      %p58 = scmp.eq.s32.totalorder %s18, 0
      %p59 = por %p57, %p58
      %s61 = sadd.s32 %s60, 1
      %p64 = scmp.eq.s32.totalorder %s12, 1
      %p65 = scmp.ne.s32.totalorder %s60, %s62
      %p66 = scmp.eq.s32.totalorder %s12, 0
      %p67 = por %p65, %p66
      %p68 = scmp.ne.s32.totalorder %s60, %s62
      %p69 = scmp.eq.s32.totalorder %s17, 1
      %p70 = por %p68, %p69
      %p71 = scmp.ne.s32.totalorder %s62, %s63
      %p72 = scmp.eq.s32.totalorder %s17, 0
      %p73 = por %p71, %p72
      %p74 = scmp.ne.s32.totalorder %s62, %s63
      %p75 = scmp.eq.s32.totalorder %s18, 1
      %p76 = por %p74, %p75
      %p78 = scmp.ne.s32.totalorder %s63, %s77
      %p79 = scmp.eq.s32.totalorder %s18, 0
      %p80 = por %p78, %p79
      %s82 = sadd.s32 %s81, 1
      %p85 = scmp.eq.s32.totalorder %s12, 1
      %p86 = scmp.ne.s32.totalorder %s81, %s83
      %p87 = scmp.eq.s32.totalorder %s12, 0
      %p88 = por %p86, %p87
      %p89 = scmp.ne.s32.totalorder %s81, %s83
      %p90 = scmp.eq.s32.totalorder %s17, 1
      %p91 = por %p89, %p90
      %p92 = scmp.ne.s32.totalorder %s83, %s84
      %p93 = scmp.eq.s32.totalorder %s17, 0
      %p94 = por %p92, %p93
      %p95 = scmp.ne.s32.totalorder %s83, %s84
      %p96 = scmp.eq.s32.totalorder %s18, 1
      %p97 = por %p95, %p96
      %p99 = scmp.ne.s32.totalorder %s84, %s98
      %p100 = scmp.eq.s32.totalorder %s18, 0
      %p101 = por %p99, %p100
      %s102 = ssub.s32 %s19, %s31
      %p103 = scmp.eq.s32.totalorder %s102, 0
      %s105 = sadd.s32 %s104, 1
      %s106 = scalar_select %p103, %s104, %s105
      %p109 = pneg %p103
      %p110 = scmp.eq.s32.totalorder %s12, 1
      %p111 = por %p109, %p110
      %p112 = scmp.ne.s32.totalorder %s104, %s107
      %p113 = scmp.eq.s32.totalorder %s12, 0
      %p114 = por %p112, %p113
      %p115 = scmp.ne.s32.totalorder %s104, %s107
      %p116 = scmp.eq.s32.totalorder %s17, 1
      %p117 = por %p115, %p116
      %p118 = scmp.ne.s32.totalorder %s107, %s108
      %p119 = scmp.eq.s32.totalorder %s17, 0
      %p120 = por %p118, %p119
      %p121 = scmp.ne.s32.totalorder %s107, %s108
      %p122 = scmp.eq.s32.totalorder %s18, 1
      %p123 = por %p121, %p122
      %p125 = scmp.ne.s32.totalorder %s108, %s124
      %p126 = scmp.eq.s32.totalorder %s18, 0
      %p127 = por %p125, %p126
      %p128 = scmp.le.s32.totalorder 1, %s12
      %p129 = scmp.lt.s32.totalorder %s12, 3
      %p130 = pnand %p128, %p129
      %p131 = pneg %p130
      // Predicated region
      $region9: #{tpu_custom_call.1} parent=5 // pred_check
        _
      $region10: #{tpu_custom_call.1} parent=5 // pred_check_branch
        %133 = sbr.rel (%p130) target = $region12
      $region11: #{tpu_custom_call.1} parent=5 // pred_region
        %s134 = ssub.s32 %s12, 1
        // Predicated region
        $region13: #{tpu_custom_call.1} parent=11 // pred_check
          %p135 = pneg %p73
        $region14: #{tpu_custom_call.1} parent=11 // pred_check_branch
          %137 = sbr.rel (%p135) target = $region16
        $region15: #{tpu_custom_call.1} parent=11 // pred_region
          _
        $region16: #{tpu_custom_call.1} parent=11 // pred_fallthru
          _
        // Predicated region
        $region17: #{tpu_custom_call.1} parent=11 // pred_check
          %p138 = pneg %p94
        $region18: #{tpu_custom_call.1} parent=11 // pred_check_branch
          %140 = sbr.rel (%p138) target = $region20
        $region19: #{tpu_custom_call.1} parent=11 // pred_region
          _
        $region20: #{tpu_custom_call.1} parent=11 // pred_fallthru
          _
      $region12: #{tpu_custom_call.1} parent=5 // pred_fallthru
        _
      %p141 = scmp.lt.s32.totalorder %s12, 2
      // Predicated region
      $region21: #{tpu_custom_call.1} parent=5 // pred_check
        %p142 = pneg %p141
      $region22: #{tpu_custom_call.1} parent=5 // pred_check_branch
        %144 = sbr.rel (%p142) target = $region24
      $region23: #{tpu_custom_call.1} parent=5 // pred_region
        // Predicated region
        $region25: #{tpu_custom_call.1} parent=23 // pred_check
          %p145 = pneg %p46
        $region26: #{tpu_custom_call.1} parent=23 // pred_check_branch
          %147 = sbr.rel (%p145) target = $region28
        $region27: #{tpu_custom_call.1} parent=23 // pred_region
          %s148 = sand.u32 %s36, 1
          %s149 = scalar_lea.sflag [#allocation5], %s148
          %s150 = sand.u32 %s36, 1
          %s151 = smul.addr %s150, 512
          %s152 = scalar_lea.vmem [#allocation4], %s151
          %s153 = smul.u32 2, %s20
          %s155 = ssub.s32 8192, 8192
          %156 = vsyncadd %s149, %s155
          %s157 = smul.addr %s19, 64
          %s158 = sadd.s32 %s153, %s157
          %s159 = smul.addr %s158, 128
          %s160 = scalar_lea.hbm %s0, %s159
          %s161 = sshll.u32 %s152, 4
          %s162 = int_to_ptr.vmem [resolvable:$true] %s161
          %167 = dma.hbm_to_vmem [thread:$0]  %s160, 8192, %s162, %s149, 256, 256, 16
        $region28: #{tpu_custom_call.1} parent=23 // pred_fallthru
          _
      $region24: #{tpu_custom_call.1} parent=5 // pred_fallthru
        _
      %p168 = scmp.le.s32.totalorder 1, %s12
      %p169 = scmp.lt.s32.totalorder %s12, 3
      %p170 = pnand %p168, %p169
      %p171 = pneg %p170
      // Predicated region
      $region29: #{tpu_custom_call.1} parent=5 // pred_check
        _
      $region30: #{tpu_custom_call.1} parent=5 // pred_check_branch
        %173 = sbr.rel (%p170) target = $region32
      $region31: #{tpu_custom_call.1} parent=5 // pred_region
        %s174 = ssub.s32 %s12, 1
        %s175 = sand.u32 %s39, 1
        %s176 = scalar_lea.sflag [#allocation5], %s175
        %s177 = sand.u32 %s39, 1
        %s178 = smul.addr %s177, 512
        %s179 = scalar_lea.vmem [#allocation4], %s178
        // Predicated region
        $region33: #{tpu_custom_call.1} parent=31 // pred_check
          %p180 = pneg %p52
        $region34: #{tpu_custom_call.1} parent=31 // pred_check_branch
          %182 = sbr.rel (%p180) target = $region36
        $region35: #{tpu_custom_call.1} parent=31 // pred_region
          %183 = dma.done %s176, 8192
        $region36: #{tpu_custom_call.1} parent=31 // pred_fallthru
          _
        %s184 = sand.u32 %s39, 1
        %s185 = scalar_lea.sflag [#allocation5], %s184
        %s186 = sand.u32 %s39, 1
        %s187 = smul.addr %s186, 512
        %s188 = scalar_lea.vmem [#allocation4], %s187
        %p189 = pneg %p52
        %p190 = pneg %p49
        %p191 = pneg %p73
        %p192 = pneg %p70
        %p193 = pneg %p94
        %p194 = pneg %p91
        %p195 = pneg %p120
        %p196 = pneg %p117
        %p197 = scmp.lt.s32.totalorder %s21, 1
        %s198 = scalar_select %p197, %s21, 1
        %s199 = smul.addr %s198, 32
        %s200 = smul.addr %s199, 8
        %s201 = scalar_lea.vmem %s3, %s200
        %s202 = smul.u32 2, %s22
        %p203 = scmp.lt.s32.totalorder %s21, 1
        %s204 = scalar_select %p203, %s21, 1
        %s205 = smul.addr %s204, 32
        %s206 = smul.addr %s205, 8
        %s207 = scalar_lea.vmem %s3, %s206
        %p208 = scmp.eq.s32.totalorder %s22, 0
        // Predicated region
        $region37: #{tpu_custom_call.1} parent=31 // pred_check
          %p209 = pneg %p208
        $region38: #{tpu_custom_call.1} parent=31 // pred_check_branch
          %211 = sbr.rel (%p209) target = $region40
        $region39: #{tpu_custom_call.1} parent=31 // pred_region
          %vm212 = vcmask 7168
          %213 = vst.msk [vmem:[#allocation2] sm:$0xff] %vm212, 0.0
          %214 = vst.msk [vmem:[#allocation2 + $0x8] sm:$0xff] %vm212, 0.0
          %215 = vst.msk [vmem:[#allocation2 + $0x10] sm:$0xff] %vm212, 0.0
          %216 = vst.msk [vmem:[#allocation2 + $0x18] sm:$0xff] %vm212, 0.0
          %217 = vst.msk [vmem:[#allocation2 + $0x20] sm:$0xff] %vm212, 0.0
          %218 = vst.msk [vmem:[#allocation2 + $0x28] sm:$0xff] %vm212, 0.0
          %219 = vst.msk [vmem:[#allocation2 + $0x30] sm:$0xff] %vm212, 0.0
          %220 = vst.msk [vmem:[#allocation2 + $0x38] sm:$0xff] %vm212, 0.0
          %221 = vst.msk [vmem:[#allocation2 + $0x40] sm:$0xff] %vm212, 0.0
          %222 = vst.msk [vmem:[#allocation2 + $0x48] sm:$0xff] %vm212, 0.0
          %223 = vst.msk [vmem:[#allocation2 + $0x50] sm:$0xff] %vm212, 0.0
          %224 = vst.msk [vmem:[#allocation2 + $0x58] sm:$0xff] %vm212, 0.0
          %225 = vst.msk [vmem:[#allocation2 + $0x60] sm:$0xff] %vm212, 0.0
          %226 = vst.msk [vmem:[#allocation2 + $0x68] sm:$0xff] %vm212, 0.0
          %227 = vst.msk [vmem:[#allocation2 + $0x70] sm:$0xff] %vm212, 0.0
          %228 = vst.msk [vmem:[#allocation2 + $0x78] sm:$0xff] %vm212, 0.0
          %229 = vst.msk [vmem:[#allocation2 + $0x80] sm:$0xff] %vm212, 0.0
          %230 = vst.msk [vmem:[#allocation2 + $0x88] sm:$0xff] %vm212, 0.0
          %231 = vst.msk [vmem:[#allocation2 + $0x90] sm:$0xff] %vm212, 0.0
          %232 = vst.msk [vmem:[#allocation2 + $0x98] sm:$0xff] %vm212, 0.0
          %233 = vst.msk [vmem:[#allocation2 + $0xa0] sm:$0xff] %vm212, 0.0
          %234 = vst.msk [vmem:[#allocation2 + $0xa8] sm:$0xff] %vm212, 0.0
          %235 = vst.msk [vmem:[#allocation2 + $0xb0] sm:$0xff] %vm212, 0.0
          %236 = vst.msk [vmem:[#allocation2 + $0xb8] sm:$0xff] %vm212, 0.0
          %237 = vst.msk [vmem:[#allocation2 + $0xc0] sm:$0xff] %vm212, 0.0
          %238 = vst.msk [vmem:[#allocation2 + $0xc8] sm:$0xff] %vm212, 0.0
          %239 = vst.msk [vmem:[#allocation2 + $0xd0] sm:$0xff] %vm212, 0.0
          %240 = vst.msk [vmem:[#allocation2 + $0xd8] sm:$0xff] %vm212, 0.0
          %241 = vst.msk [vmem:[#allocation2 + $0xe0] sm:$0xff] %vm212, 0.0
          %242 = vst.msk [vmem:[#allocation2 + $0xe8] sm:$0xff] %vm212, 0.0
          %243 = vst.msk [vmem:[#allocation2 + $0xf0] sm:$0xff] %vm212, 0.0
          %244 = vst.msk [vmem:[#allocation2 + $0xf8] sm:$0xff] %vm212, 0.0
          %245 = vst.msk [vmem:[#allocation3] sm:$0xff] %vm212, 0.0
          %246 = vst.msk [vmem:[#allocation3 + $0x8] sm:$0xff] %vm212, 0.0
          %247 = vst.msk [vmem:[#allocation3 + $0x10] sm:$0xff] %vm212, 0.0
          %248 = vst.msk [vmem:[#allocation3 + $0x18] sm:$0xff] %vm212, 0.0
          %249 = vst.msk [vmem:[#allocation3 + $0x20] sm:$0xff] %vm212, 0.0
          %250 = vst.msk [vmem:[#allocation3 + $0x28] sm:$0xff] %vm212, 0.0
          %251 = vst.msk [vmem:[#allocation3 + $0x30] sm:$0xff] %vm212, 0.0
          %252 = vst.msk [vmem:[#allocation3 + $0x38] sm:$0xff] %vm212, 0.0
          %253 = vst.msk [vmem:[#allocation3 + $0x40] sm:$0xff] %vm212, 0.0
          %254 = vst.msk [vmem:[#allocation3 + $0x48] sm:$0xff] %vm212, 0.0
          %255 = vst.msk [vmem:[#allocation3 + $0x50] sm:$0xff] %vm212, 0.0
          %256 = vst.msk [vmem:[#allocation3 + $0x58] sm:$0xff] %vm212, 0.0
          %257 = vst.msk [vmem:[#allocation3 + $0x60] sm:$0xff] %vm212, 0.0
          %258 = vst.msk [vmem:[#allocation3 + $0x68] sm:$0xff] %vm212, 0.0
          %259 = vst.msk [vmem:[#allocation3 + $0x70] sm:$0xff] %vm212, 0.0
          %260 = vst.msk [vmem:[#allocation3 + $0x78] sm:$0xff] %vm212, 0.0
          %261 = vst.msk [vmem:[#allocation3 + $0x80] sm:$0xff] %vm212, 0.0
          %262 = vst.msk [vmem:[#allocation3 + $0x88] sm:$0xff] %vm212, 0.0
          %263 = vst.msk [vmem:[#allocation3 + $0x90] sm:$0xff] %vm212, 0.0
          %264 = vst.msk [vmem:[#allocation3 + $0x98] sm:$0xff] %vm212, 0.0
          %265 = vst.msk [vmem:[#allocation3 + $0xa0] sm:$0xff] %vm212, 0.0
          %266 = vst.msk [vmem:[#allocation3 + $0xa8] sm:$0xff] %vm212, 0.0
          %267 = vst.msk [vmem:[#allocation3 + $0xb0] sm:$0xff] %vm212, 0.0
          %268 = vst.msk [vmem:[#allocation3 + $0xb8] sm:$0xff] %vm212, 0.0
          %269 = vst.msk [vmem:[#allocation3 + $0xc0] sm:$0xff] %vm212, 0.0
          %270 = vst.msk [vmem:[#allocation3 + $0xc8] sm:$0xff] %vm212, 0.0
          %271 = vst.msk [vmem:[#allocation3 + $0xd0] sm:$0xff] %vm212, 0.0
          %272 = vst.msk [vmem:[#allocation3 + $0xd8] sm:$0xff] %vm212, 0.0
          %273 = vst.msk [vmem:[#allocation3 + $0xe0] sm:$0xff] %vm212, 0.0
          %274 = vst.msk [vmem:[#allocation3 + $0xe8] sm:$0xff] %vm212, 0.0
          %275 = vst.msk [vmem:[#allocation3 + $0xf0] sm:$0xff] %vm212, 0.0
          %276 = vst.msk [vmem:[#allocation3 + $0xf8] sm:$0xff] %vm212, 0.0
        $region40: #{tpu_custom_call.1} parent=31 // pred_fallthru
          _
        %v277 = vld [vmem:[%s179] sm:$0xff]
        %v278 = vld [vmem:[%s179 + $0x8] sm:$0xff]
        %v279 = vld [vmem:[%s179 + $0x10] sm:$0xff]
        %v280 = vld [vmem:[%s179 + $0x18] sm:$0xff]
        %v281 = vld [vmem:[%s179 + $0x20] sm:$0xff]
        %v282 = vld [vmem:[%s179 + $0x28] sm:$0xff]
        %v283 = vld [vmem:[%s179 + $0x30] sm:$0xff]
        %v284 = vld [vmem:[%s179 + $0x38] sm:$0xff]
        %v285 = vld [vmem:[%s179 + $0x40] sm:$0xff]
        %v286 = vld [vmem:[%s179 + $0x48] sm:$0xff]
        %v287 = vld [vmem:[%s179 + $0x50] sm:$0xff]
        %v288 = vld [vmem:[%s179 + $0x58] sm:$0xff]
        %v289 = vld [vmem:[%s179 + $0x60] sm:$0xff]
        %v290 = vld [vmem:[%s179 + $0x68] sm:$0xff]
        %v291 = vld [vmem:[%s179 + $0x70] sm:$0xff]
        %v292 = vld [vmem:[%s179 + $0x78] sm:$0xff]
        %v293 = vld [vmem:[%s179 + $0x80] sm:$0xff]
        %v294 = vld [vmem:[%s179 + $0x88] sm:$0xff]
        %v295 = vld [vmem:[%s179 + $0x90] sm:$0xff]
        %v296 = vld [vmem:[%s179 + $0x98] sm:$0xff]
        %v297 = vld [vmem:[%s179 + $0xa0] sm:$0xff]
        %v298 = vld [vmem:[%s179 + $0xa8] sm:$0xff]
        %v299 = vld [vmem:[%s179 + $0xb0] sm:$0xff]
        %v300 = vld [vmem:[%s179 + $0xb8] sm:$0xff]
        %v301 = vld [vmem:[%s179 + $0xc0] sm:$0xff]
        %v302 = vld [vmem:[%s179 + $0xc8] sm:$0xff]
        %v303 = vld [vmem:[%s179 + $0xd0] sm:$0xff]
        %v304 = vld [vmem:[%s179 + $0xd8] sm:$0xff]
        %v305 = vld [vmem:[%s179 + $0xe0] sm:$0xff]
        %v306 = vld [vmem:[%s179 + $0xe8] sm:$0xff]
        %v307 = vld [vmem:[%s179 + $0xf0] sm:$0xff]
        %v308 = vld [vmem:[%s179 + $0xf8] sm:$0xff]
        %v309 = vld [vmem:[%s179 + $0x100] sm:$0xff]
        %v310 = vld [vmem:[%s179 + $0x108] sm:$0xff]
        %v311 = vld [vmem:[%s179 + $0x110] sm:$0xff]
        %v312 = vld [vmem:[%s179 + $0x118] sm:$0xff]
        %v313 = vld [vmem:[%s179 + $0x120] sm:$0xff]
        %v314 = vld [vmem:[%s179 + $0x128] sm:$0xff]
        %v315 = vld [vmem:[%s179 + $0x130] sm:$0xff]
        %v316 = vld [vmem:[%s179 + $0x138] sm:$0xff]
        %v317 = vld [vmem:[%s179 + $0x140] sm:$0xff]
        %v318 = vld [vmem:[%s179 + $0x148] sm:$0xff]
        %v319 = vld [vmem:[%s179 + $0x150] sm:$0xff]
        %v320 = vld [vmem:[%s179 + $0x158] sm:$0xff]
        %v321 = vld [vmem:[%s179 + $0x160] sm:$0xff]
        %v322 = vld [vmem:[%s179 + $0x168] sm:$0xff]
        %v323 = vld [vmem:[%s179 + $0x170] sm:$0xff]
        %v324 = vld [vmem:[%s179 + $0x178] sm:$0xff]
        %v325 = vld [vmem:[%s179 + $0x180] sm:$0xff]
        %v326 = vld [vmem:[%s179 + $0x188] sm:$0xff]
        %v327 = vld [vmem:[%s179 + $0x190] sm:$0xff]
        %v328 = vld [vmem:[%s179 + $0x198] sm:$0xff]
        %v329 = vld [vmem:[%s179 + $0x1a0] sm:$0xff]
        %v330 = vld [vmem:[%s179 + $0x1a8] sm:$0xff]
        %v331 = vld [vmem:[%s179 + $0x1b0] sm:$0xff]
        %v332 = vld [vmem:[%s179 + $0x1b8] sm:$0xff]
        %v333 = vld [vmem:[%s179 + $0x1c0] sm:$0xff]
        %v334 = vld [vmem:[%s179 + $0x1c8] sm:$0xff]
        %v335 = vld [vmem:[%s179 + $0x1d0] sm:$0xff]
        %v336 = vld [vmem:[%s179 + $0x1d8] sm:$0xff]
        %v337 = vld [vmem:[%s179 + $0x1e0] sm:$0xff]
        %v338 = vld [vmem:[%s179 + $0x1e8] sm:$0xff]
        %v339 = vld [vmem:[%s179 + $0x1f0] sm:$0xff]
        %v340 = vld [vmem:[%s179 + $0x1f8] sm:$0xff]
        %v341 = vld [vmem:[#allocation2] sm:$0xff]
        %v342 = vld [vmem:[#allocation2 + $0x8] sm:$0xff]
        %v343 = vld [vmem:[#allocation2 + $0x10] sm:$0xff]
        %v344 = vld [vmem:[#allocation2 + $0x18] sm:$0xff]
        %v345 = vld [vmem:[#allocation2 + $0x20] sm:$0xff]
        %v346 = vld [vmem:[#allocation2 + $0x28] sm:$0xff]
        %v347 = vld [vmem:[#allocation2 + $0x30] sm:$0xff]
        %v348 = vld [vmem:[#allocation2 + $0x38] sm:$0xff]
        %v349 = vld [vmem:[#allocation2 + $0x40] sm:$0xff]
        %v350 = vld [vmem:[#allocation2 + $0x48] sm:$0xff]
        %v351 = vld [vmem:[#allocation2 + $0x50] sm:$0xff]
        %v352 = vld [vmem:[#allocation2 + $0x58] sm:$0xff]
        %v353 = vld [vmem:[#allocation2 + $0x60] sm:$0xff]
        %v354 = vld [vmem:[#allocation2 + $0x68] sm:$0xff]
        %v355 = vld [vmem:[#allocation2 + $0x70] sm:$0xff]
        %v356 = vld [vmem:[#allocation2 + $0x78] sm:$0xff]
        %v357 = vld [vmem:[#allocation2 + $0x80] sm:$0xff]
        %v358 = vld [vmem:[#allocation2 + $0x88] sm:$0xff]
        %v359 = vld [vmem:[#allocation2 + $0x90] sm:$0xff]
        %v360 = vld [vmem:[#allocation2 + $0x98] sm:$0xff]
        %v361 = vld [vmem:[#allocation2 + $0xa0] sm:$0xff]
        %v362 = vld [vmem:[#allocation2 + $0xa8] sm:$0xff]
        %v363 = vld [vmem:[#allocation2 + $0xb0] sm:$0xff]
        %v364 = vld [vmem:[#allocation2 + $0xb8] sm:$0xff]
        %v365 = vld [vmem:[#allocation2 + $0xc0] sm:$0xff]
        %v366 = vld [vmem:[#allocation2 + $0xc8] sm:$0xff]
        %v367 = vld [vmem:[#allocation2 + $0xd0] sm:$0xff]
        %v368 = vld [vmem:[#allocation2 + $0xd8] sm:$0xff]
        %v369 = vld [vmem:[#allocation2 + $0xe0] sm:$0xff]
        %v370 = vld [vmem:[#allocation2 + $0xe8] sm:$0xff]
        %v371 = vld [vmem:[#allocation2 + $0xf0] sm:$0xff]
        %v372 = vld [vmem:[#allocation2 + $0xf8] sm:$0xff]
        %v373 = vadd.f32 %v277, %v278
        %374 = vadd.xlane.f32.xlu0 %v373
        %v375 = vpop.xlane.xlu0 %374
        %v376 = vadd.f32 %v279, %v280
        %377 = vadd.xlane.f32.xlu0 %v376
        %v378 = vpop.xlane.xlu0 %377
        %v379 = vadd.f32 %v281, %v282
        %380 = vadd.xlane.f32.xlu0 %v379
        %v381 = vpop.xlane.xlu0 %380
        %v382 = vadd.f32 %v283, %v284
        %383 = vadd.xlane.f32.xlu0 %v382
        %v384 = vpop.xlane.xlu0 %383
        %v385 = vadd.f32 %v285, %v286
        %386 = vadd.xlane.f32.xlu0 %v385
        %v387 = vpop.xlane.xlu0 %386
        %v388 = vadd.f32 %v287, %v288
        %389 = vadd.xlane.f32.xlu0 %v388
        %v390 = vpop.xlane.xlu0 %389
        %v391 = vadd.f32 %v289, %v290
        %392 = vadd.xlane.f32.xlu0 %v391
        %v393 = vpop.xlane.xlu0 %392
        %v394 = vadd.f32 %v291, %v292
        %395 = vadd.xlane.f32.xlu0 %v394
        %v396 = vpop.xlane.xlu0 %395
        %v397 = vadd.f32 %v293, %v294
        %398 = vadd.xlane.f32.xlu0 %v397
        %v399 = vpop.xlane.xlu0 %398
        %v400 = vadd.f32 %v295, %v296
        %401 = vadd.xlane.f32.xlu0 %v400
        %v402 = vpop.xlane.xlu0 %401
        %v403 = vadd.f32 %v297, %v298
        %404 = vadd.xlane.f32.xlu0 %v403
        %v405 = vpop.xlane.xlu0 %404
        %v406 = vadd.f32 %v299, %v300
        %407 = vadd.xlane.f32.xlu0 %v406
        %v408 = vpop.xlane.xlu0 %407
        %v409 = vadd.f32 %v301, %v302
        %410 = vadd.xlane.f32.xlu0 %v409
        %v411 = vpop.xlane.xlu0 %410
        %v412 = vadd.f32 %v303, %v304
        %413 = vadd.xlane.f32.xlu0 %v412
        %v414 = vpop.xlane.xlu0 %413
        %v415 = vadd.f32 %v305, %v306
        %416 = vadd.xlane.f32.xlu0 %v415
        %v417 = vpop.xlane.xlu0 %416
        %v418 = vadd.f32 %v307, %v308
        %419 = vadd.xlane.f32.xlu0 %v418
        %v420 = vpop.xlane.xlu0 %419
        %v421 = vadd.f32 %v309, %v310
        %422 = vadd.xlane.f32.xlu0 %v421
        %v423 = vpop.xlane.xlu0 %422
        %v424 = vadd.f32 %v311, %v312
        %425 = vadd.xlane.f32.xlu0 %v424
        %v426 = vpop.xlane.xlu0 %425
        %v427 = vadd.f32 %v313, %v314
        %428 = vadd.xlane.f32.xlu0 %v427
        %v429 = vpop.xlane.xlu0 %428
        %v430 = vadd.f32 %v315, %v316
        %431 = vadd.xlane.f32.xlu0 %v430
        %v432 = vpop.xlane.xlu0 %431
        %v433 = vadd.f32 %v317, %v318
        %434 = vadd.xlane.f32.xlu0 %v433
        %v435 = vpop.xlane.xlu0 %434
        %v436 = vadd.f32 %v319, %v320
        %437 = vadd.xlane.f32.xlu0 %v436
        %v438 = vpop.xlane.xlu0 %437
        %v439 = vadd.f32 %v321, %v322
        %440 = vadd.xlane.f32.xlu0 %v439
        %v441 = vpop.xlane.xlu0 %440
        %v442 = vadd.f32 %v323, %v324
        %443 = vadd.xlane.f32.xlu0 %v442
        %v444 = vpop.xlane.xlu0 %443
        %v445 = vadd.f32 %v325, %v326
        %446 = vadd.xlane.f32.xlu0 %v445
        %v447 = vpop.xlane.xlu0 %446
        %v448 = vadd.f32 %v327, %v328
        %449 = vadd.xlane.f32.xlu0 %v448
        %v450 = vpop.xlane.xlu0 %449
        %v451 = vadd.f32 %v329, %v330
        %452 = vadd.xlane.f32.xlu0 %v451
        %v453 = vpop.xlane.xlu0 %452
        %v454 = vadd.f32 %v331, %v332
        %455 = vadd.xlane.f32.xlu0 %v454
        %v456 = vpop.xlane.xlu0 %455
        %v457 = vadd.f32 %v333, %v334
        %458 = vadd.xlane.f32.xlu0 %v457
        %v459 = vpop.xlane.xlu0 %458
        %v460 = vadd.f32 %v335, %v336
        %461 = vadd.xlane.f32.xlu0 %v460
        %v462 = vpop.xlane.xlu0 %461
        %v463 = vadd.f32 %v337, %v338
        %464 = vadd.xlane.f32.xlu0 %v463
        %v465 = vpop.xlane.xlu0 %464
        %v466 = vadd.f32 %v339, %v340
        %467 = vadd.xlane.f32.xlu0 %v466
        %v468 = vpop.xlane.xlu0 %467
        %v469 = vadd.f32 %v341, %v375
        %v470 = vadd.f32 %v342, %v378
        %v471 = vadd.f32 %v343, %v381
        %v472 = vadd.f32 %v344, %v384
        %v473 = vadd.f32 %v345, %v387
        %v474 = vadd.f32 %v346, %v390
        %v475 = vadd.f32 %v347, %v393
        %v476 = vadd.f32 %v348, %v396
        %v477 = vadd.f32 %v349, %v399
        %v478 = vadd.f32 %v350, %v402
        %v479 = vadd.f32 %v351, %v405
        %v480 = vadd.f32 %v352, %v408
        %v481 = vadd.f32 %v353, %v411
        %v482 = vadd.f32 %v354, %v414
        %v483 = vadd.f32 %v355, %v417
        %v484 = vadd.f32 %v356, %v420
        %v485 = vadd.f32 %v357, %v423
        %v486 = vadd.f32 %v358, %v426
        %v487 = vadd.f32 %v359, %v429
        %v488 = vadd.f32 %v360, %v432
        %v489 = vadd.f32 %v361, %v435
        %v490 = vadd.f32 %v362, %v438
        %v491 = vadd.f32 %v363, %v441
        %v492 = vadd.f32 %v364, %v444
        %v493 = vadd.f32 %v365, %v447
        %v494 = vadd.f32 %v366, %v450
        %v495 = vadd.f32 %v367, %v453
        %v496 = vadd.f32 %v368, %v456
        %v497 = vadd.f32 %v369, %v459
        %v498 = vadd.f32 %v370, %v462
        %v499 = vadd.f32 %v371, %v465
        %v500 = vadd.f32 %v372, %v468
        %vm501 = vcmask 7168
        %502 = vst.msk [vmem:[#allocation2] sm:$0xff] %vm501, %v469
        %503 = vst.msk [vmem:[#allocation2 + $0x8] sm:$0xff] %vm501, %v470
        %504 = vst.msk [vmem:[#allocation2 + $0x10] sm:$0xff] %vm501, %v471
        %505 = vst.msk [vmem:[#allocation2 + $0x18] sm:$0xff] %vm501, %v472
        %506 = vst.msk [vmem:[#allocation2 + $0x20] sm:$0xff] %vm501, %v473
        %507 = vst.msk [vmem:[#allocation2 + $0x28] sm:$0xff] %vm501, %v474
        %508 = vst.msk [vmem:[#allocation2 + $0x30] sm:$0xff] %vm501, %v475
        %509 = vst.msk [vmem:[#allocation2 + $0x38] sm:$0xff] %vm501, %v476
        %510 = vst.msk [vmem:[#allocation2 + $0x40] sm:$0xff] %vm501, %v477
        %511 = vst.msk [vmem:[#allocation2 + $0x48] sm:$0xff] %vm501, %v478
        %512 = vst.msk [vmem:[#allocation2 + $0x50] sm:$0xff] %vm501, %v479
        %513 = vst.msk [vmem:[#allocation2 + $0x58] sm:$0xff] %vm501, %v480
        %514 = vst.msk [vmem:[#allocation2 + $0x60] sm:$0xff] %vm501, %v481
        %515 = vst.msk [vmem:[#allocation2 + $0x68] sm:$0xff] %vm501, %v482
        %516 = vst.msk [vmem:[#allocation2 + $0x70] sm:$0xff] %vm501, %v483
        %517 = vst.msk [vmem:[#allocation2 + $0x78] sm:$0xff] %vm501, %v484
        %518 = vst.msk [vmem:[#allocation2 + $0x80] sm:$0xff] %vm501, %v485
        %519 = vst.msk [vmem:[#allocation2 + $0x88] sm:$0xff] %vm501, %v486
        %520 = vst.msk [vmem:[#allocation2 + $0x90] sm:$0xff] %vm501, %v487
        %521 = vst.msk [vmem:[#allocation2 + $0x98] sm:$0xff] %vm501, %v488
        %522 = vst.msk [vmem:[#allocation2 + $0xa0] sm:$0xff] %vm501, %v489
        %523 = vst.msk [vmem:[#allocation2 + $0xa8] sm:$0xff] %vm501, %v490
        %524 = vst.msk [vmem:[#allocation2 + $0xb0] sm:$0xff] %vm501, %v491
        %525 = vst.msk [vmem:[#allocation2 + $0xb8] sm:$0xff] %vm501, %v492
        %526 = vst.msk [vmem:[#allocation2 + $0xc0] sm:$0xff] %vm501, %v493
        %527 = vst.msk [vmem:[#allocation2 + $0xc8] sm:$0xff] %vm501, %v494
        %528 = vst.msk [vmem:[#allocation2 + $0xd0] sm:$0xff] %vm501, %v495
        %529 = vst.msk [vmem:[#allocation2 + $0xd8] sm:$0xff] %vm501, %v496
        %530 = vst.msk [vmem:[#allocation2 + $0xe0] sm:$0xff] %vm501, %v497
        %531 = vst.msk [vmem:[#allocation2 + $0xe8] sm:$0xff] %vm501, %v498
        %532 = vst.msk [vmem:[#allocation2 + $0xf0] sm:$0xff] %vm501, %v499
        %533 = vst.msk [vmem:[#allocation2 + $0xf8] sm:$0xff] %vm501, %v500
        %v534 = vld [vmem:[#allocation3] sm:$0xff]
        %v535 = vld [vmem:[#allocation3 + $0x8] sm:$0xff]
        %v536 = vld [vmem:[#allocation3 + $0x10] sm:$0xff]
        %v537 = vld [vmem:[#allocation3 + $0x18] sm:$0xff]
        %v538 = vld [vmem:[#allocation3 + $0x20] sm:$0xff]
        %v539 = vld [vmem:[#allocation3 + $0x28] sm:$0xff]
        %v540 = vld [vmem:[#allocation3 + $0x30] sm:$0xff]
        %v541 = vld [vmem:[#allocation3 + $0x38] sm:$0xff]
        %v542 = vld [vmem:[#allocation3 + $0x40] sm:$0xff]
        %v543 = vld [vmem:[#allocation3 + $0x48] sm:$0xff]
        %v544 = vld [vmem:[#allocation3 + $0x50] sm:$0xff]
        %v545 = vld [vmem:[#allocation3 + $0x58] sm:$0xff]
        %v546 = vld [vmem:[#allocation3 + $0x60] sm:$0xff]
        %v547 = vld [vmem:[#allocation3 + $0x68] sm:$0xff]
        %v548 = vld [vmem:[#allocation3 + $0x70] sm:$0xff]
        %v549 = vld [vmem:[#allocation3 + $0x78] sm:$0xff]
        %v550 = vld [vmem:[#allocation3 + $0x80] sm:$0xff]
        %v551 = vld [vmem:[#allocation3 + $0x88] sm:$0xff]
        %v552 = vld [vmem:[#allocation3 + $0x90] sm:$0xff]
        %v553 = vld [vmem:[#allocation3 + $0x98] sm:$0xff]
        %v554 = vld [vmem:[#allocation3 + $0xa0] sm:$0xff]
        %v555 = vld [vmem:[#allocation3 + $0xa8] sm:$0xff]
        %v556 = vld [vmem:[#allocation3 + $0xb0] sm:$0xff]
        %v557 = vld [vmem:[#allocation3 + $0xb8] sm:$0xff]
        %v558 = vld [vmem:[#allocation3 + $0xc0] sm:$0xff]
        %v559 = vld [vmem:[#allocation3 + $0xc8] sm:$0xff]
        %v560 = vld [vmem:[#allocation3 + $0xd0] sm:$0xff]
        %v561 = vld [vmem:[#allocation3 + $0xd8] sm:$0xff]
        %v562 = vld [vmem:[#allocation3 + $0xe0] sm:$0xff]
        %v563 = vld [vmem:[#allocation3 + $0xe8] sm:$0xff]
        %v564 = vld [vmem:[#allocation3 + $0xf0] sm:$0xff]
        %v565 = vld [vmem:[#allocation3 + $0xf8] sm:$0xff]
        %v566 = vmul.f32 %v277, %v277
        %v567 = vmul.f32 %v278, %v278
        %v568 = vmul.f32 %v279, %v279
        %v569 = vmul.f32 %v280, %v280
        %v570 = vmul.f32 %v281, %v281
        %v571 = vmul.f32 %v282, %v282
        %v572 = vmul.f32 %v283, %v283
        %v573 = vmul.f32 %v284, %v284
        %v574 = vmul.f32 %v285, %v285
        %v575 = vmul.f32 %v286, %v286
        %v576 = vmul.f32 %v287, %v287
        %v577 = vmul.f32 %v288, %v288
        %v578 = vmul.f32 %v289, %v289
        %v579 = vmul.f32 %v290, %v290
        %v580 = vmul.f32 %v291, %v291
        %v581 = vmul.f32 %v292, %v292
        %v582 = vmul.f32 %v293, %v293
        %v583 = vmul.f32 %v294, %v294
        %v584 = vmul.f32 %v295, %v295
        %v585 = vmul.f32 %v296, %v296
        %v586 = vmul.f32 %v297, %v297
        %v587 = vmul.f32 %v298, %v298
        %v588 = vmul.f32 %v299, %v299
        %v589 = vmul.f32 %v300, %v300
        %v590 = vmul.f32 %v301, %v301
        %v591 = vmul.f32 %v302, %v302
        %v592 = vmul.f32 %v303, %v303
        %v593 = vmul.f32 %v304, %v304
        %v594 = vmul.f32 %v305, %v305
        %v595 = vmul.f32 %v306, %v306
        %v596 = vmul.f32 %v307, %v307
        %v597 = vmul.f32 %v308, %v308
        %v598 = vmul.f32 %v309, %v309
        %v599 = vmul.f32 %v310, %v310
        %v600 = vmul.f32 %v311, %v311
        %v601 = vmul.f32 %v312, %v312
        %v602 = vmul.f32 %v313, %v313
        %v603 = vmul.f32 %v314, %v314
        %v604 = vmul.f32 %v315, %v315
        %v605 = vmul.f32 %v316, %v316
        %v606 = vmul.f32 %v317, %v317
        %v607 = vmul.f32 %v318, %v318
        %v608 = vmul.f32 %v319, %v319
        %v609 = vmul.f32 %v320, %v320
        %v610 = vmul.f32 %v321, %v321
        %v611 = vmul.f32 %v322, %v322
        %v612 = vmul.f32 %v323, %v323
        %v613 = vmul.f32 %v324, %v324
        %v614 = vmul.f32 %v325, %v325
        %v615 = vmul.f32 %v326, %v326
        %v616 = vmul.f32 %v327, %v327
        %v617 = vmul.f32 %v328, %v328
        %v618 = vmul.f32 %v329, %v329
        %v619 = vmul.f32 %v330, %v330
        %v620 = vmul.f32 %v331, %v331
        %v621 = vmul.f32 %v332, %v332
        %v622 = vmul.f32 %v333, %v333
        %v623 = vmul.f32 %v334, %v334
        %v624 = vmul.f32 %v335, %v335
        %v625 = vmul.f32 %v336, %v336
        %v626 = vmul.f32 %v337, %v337
        %v627 = vmul.f32 %v338, %v338
        %v628 = vmul.f32 %v339, %v339
        %v629 = vmul.f32 %v340, %v340
        %v630 = vadd.f32 %v566, %v567
        %631 = vadd.xlane.f32.xlu0 %v630
        %v632 = vpop.xlane.xlu0 %631
        %v633 = vadd.f32 %v568, %v569
        %634 = vadd.xlane.f32.xlu0 %v633
        %v635 = vpop.xlane.xlu0 %634
        %v636 = vadd.f32 %v570, %v571
        %637 = vadd.xlane.f32.xlu0 %v636
        %v638 = vpop.xlane.xlu0 %637
        %v639 = vadd.f32 %v572, %v573
        %640 = vadd.xlane.f32.xlu0 %v639
        %v641 = vpop.xlane.xlu0 %640
        %v642 = vadd.f32 %v574, %v575
        %643 = vadd.xlane.f32.xlu0 %v642
        %v644 = vpop.xlane.xlu0 %643
        %v645 = vadd.f32 %v576, %v577
        %646 = vadd.xlane.f32.xlu0 %v645
        %v647 = vpop.xlane.xlu0 %646
        %v648 = vadd.f32 %v578, %v579
        %649 = vadd.xlane.f32.xlu0 %v648
        %v650 = vpop.xlane.xlu0 %649
        %v651 = vadd.f32 %v580, %v581
        %652 = vadd.xlane.f32.xlu0 %v651
        %v653 = vpop.xlane.xlu0 %652
        %v654 = vadd.f32 %v582, %v583
        %655 = vadd.xlane.f32.xlu0 %v654
        %v656 = vpop.xlane.xlu0 %655
        %v657 = vadd.f32 %v584, %v585
        %658 = vadd.xlane.f32.xlu0 %v657
        %v659 = vpop.xlane.xlu0 %658
        %v660 = vadd.f32 %v586, %v587
        %661 = vadd.xlane.f32.xlu0 %v660
        %v662 = vpop.xlane.xlu0 %661
        %v663 = vadd.f32 %v588, %v589
        %664 = vadd.xlane.f32.xlu0 %v663
        %v665 = vpop.xlane.xlu0 %664
        %v666 = vadd.f32 %v590, %v591
        %667 = vadd.xlane.f32.xlu0 %v666
        %v668 = vpop.xlane.xlu0 %667
        %v669 = vadd.f32 %v592, %v593
        %670 = vadd.xlane.f32.xlu0 %v669
        %v671 = vpop.xlane.xlu0 %670
        %v672 = vadd.f32 %v594, %v595
        %673 = vadd.xlane.f32.xlu0 %v672
        %v674 = vpop.xlane.xlu0 %673
        %v675 = vadd.f32 %v596, %v597
        %676 = vadd.xlane.f32.xlu0 %v675
        %v677 = vpop.xlane.xlu0 %676
        %v678 = vadd.f32 %v598, %v599
        %679 = vadd.xlane.f32.xlu0 %v678
        %v680 = vpop.xlane.xlu0 %679
        %v681 = vadd.f32 %v600, %v601
        %682 = vadd.xlane.f32.xlu0 %v681
        %v683 = vpop.xlane.xlu0 %682
        %v684 = vadd.f32 %v602, %v603
        %685 = vadd.xlane.f32.xlu0 %v684
        %v686 = vpop.xlane.xlu0 %685
        %v687 = vadd.f32 %v604, %v605
        %688 = vadd.xlane.f32.xlu0 %v687
        %v689 = vpop.xlane.xlu0 %688
        %v690 = vadd.f32 %v606, %v607
        %691 = vadd.xlane.f32.xlu0 %v690
        %v692 = vpop.xlane.xlu0 %691
        %v693 = vadd.f32 %v608, %v609
        %694 = vadd.xlane.f32.xlu0 %v693
        %v695 = vpop.xlane.xlu0 %694
        %v696 = vadd.f32 %v610, %v611
        %697 = vadd.xlane.f32.xlu0 %v696
        %v698 = vpop.xlane.xlu0 %697
        %v699 = vadd.f32 %v612, %v613
        %700 = vadd.xlane.f32.xlu0 %v699
        %v701 = vpop.xlane.xlu0 %700
        %v702 = vadd.f32 %v614, %v615
        %703 = vadd.xlane.f32.xlu0 %v702
        %v704 = vpop.xlane.xlu0 %703
        %v705 = vadd.f32 %v616, %v617
        %706 = vadd.xlane.f32.xlu0 %v705
        %v707 = vpop.xlane.xlu0 %706
        %v708 = vadd.f32 %v618, %v619
        %709 = vadd.xlane.f32.xlu0 %v708
        %v710 = vpop.xlane.xlu0 %709
        %v711 = vadd.f32 %v620, %v621
        %712 = vadd.xlane.f32.xlu0 %v711
        %v713 = vpop.xlane.xlu0 %712
        %v714 = vadd.f32 %v622, %v623
        %715 = vadd.xlane.f32.xlu0 %v714
        %v716 = vpop.xlane.xlu0 %715
        %v717 = vadd.f32 %v624, %v625
        %718 = vadd.xlane.f32.xlu0 %v717
        %v719 = vpop.xlane.xlu0 %718
        %v720 = vadd.f32 %v626, %v627
        %721 = vadd.xlane.f32.xlu0 %v720
        %v722 = vpop.xlane.xlu0 %721
        %v723 = vadd.f32 %v628, %v629
        %724 = vadd.xlane.f32.xlu0 %v723
        %v725 = vpop.xlane.xlu0 %724
        %v726 = vadd.f32 %v534, %v632
        %v727 = vadd.f32 %v535, %v635
        %v728 = vadd.f32 %v536, %v638
        %v729 = vadd.f32 %v537, %v641
        %v730 = vadd.f32 %v538, %v644
        %v731 = vadd.f32 %v539, %v647
        %v732 = vadd.f32 %v540, %v650
        %v733 = vadd.f32 %v541, %v653
        %v734 = vadd.f32 %v542, %v656
        %v735 = vadd.f32 %v543, %v659
        %v736 = vadd.f32 %v544, %v662
        %v737 = vadd.f32 %v545, %v665
        %v738 = vadd.f32 %v546, %v668
        %v739 = vadd.f32 %v547, %v671
        %v740 = vadd.f32 %v548, %v674
        %v741 = vadd.f32 %v549, %v677
        %v742 = vadd.f32 %v550, %v680
        %v743 = vadd.f32 %v551, %v683
        %v744 = vadd.f32 %v552, %v686
        %v745 = vadd.f32 %v553, %v689
        %v746 = vadd.f32 %v554, %v692
        %v747 = vadd.f32 %v555, %v695
        %v748 = vadd.f32 %v556, %v698
        %v749 = vadd.f32 %v557, %v701
        %v750 = vadd.f32 %v558, %v704
        %v751 = vadd.f32 %v559, %v707
        %v752 = vadd.f32 %v560, %v710
        %v753 = vadd.f32 %v561, %v713
        %v754 = vadd.f32 %v562, %v716
        %v755 = vadd.f32 %v563, %v719
        %v756 = vadd.f32 %v564, %v722
        %v757 = vadd.f32 %v565, %v725
        %758 = vst.msk [vmem:[#allocation3] sm:$0xff] %vm501, %v726
        %759 = vst.msk [vmem:[#allocation3 + $0x8] sm:$0xff] %vm501, %v727
        %760 = vst.msk [vmem:[#allocation3 + $0x10] sm:$0xff] %vm501, %v728
        %761 = vst.msk [vmem:[#allocation3 + $0x18] sm:$0xff] %vm501, %v729
        %762 = vst.msk [vmem:[#allocation3 + $0x20] sm:$0xff] %vm501, %v730
        %763 = vst.msk [vmem:[#allocation3 + $0x28] sm:$0xff] %vm501, %v731
        %764 = vst.msk [vmem:[#allocation3 + $0x30] sm:$0xff] %vm501, %v732
        %765 = vst.msk [vmem:[#allocation3 + $0x38] sm:$0xff] %vm501, %v733
        %766 = vst.msk [vmem:[#allocation3 + $0x40] sm:$0xff] %vm501, %v734
        %767 = vst.msk [vmem:[#allocation3 + $0x48] sm:$0xff] %vm501, %v735
        %768 = vst.msk [vmem:[#allocation3 + $0x50] sm:$0xff] %vm501, %v736
        %769 = vst.msk [vmem:[#allocation3 + $0x58] sm:$0xff] %vm501, %v737
        %770 = vst.msk [vmem:[#allocation3 + $0x60] sm:$0xff] %vm501, %v738
        %771 = vst.msk [vmem:[#allocation3 + $0x68] sm:$0xff] %vm501, %v739
        %772 = vst.msk [vmem:[#allocation3 + $0x70] sm:$0xff] %vm501, %v740
        %773 = vst.msk [vmem:[#allocation3 + $0x78] sm:$0xff] %vm501, %v741
        %774 = vst.msk [vmem:[#allocation3 + $0x80] sm:$0xff] %vm501, %v742
        %775 = vst.msk [vmem:[#allocation3 + $0x88] sm:$0xff] %vm501, %v743
        %776 = vst.msk [vmem:[#allocation3 + $0x90] sm:$0xff] %vm501, %v744
        %777 = vst.msk [vmem:[#allocation3 + $0x98] sm:$0xff] %vm501, %v745
        %778 = vst.msk [vmem:[#allocation3 + $0xa0] sm:$0xff] %vm501, %v746
        %779 = vst.msk [vmem:[#allocation3 + $0xa8] sm:$0xff] %vm501, %v747
        %780 = vst.msk [vmem:[#allocation3 + $0xb0] sm:$0xff] %vm501, %v748
        %781 = vst.msk [vmem:[#allocation3 + $0xb8] sm:$0xff] %vm501, %v749
        %782 = vst.msk [vmem:[#allocation3 + $0xc0] sm:$0xff] %vm501, %v750
        %783 = vst.msk [vmem:[#allocation3 + $0xc8] sm:$0xff] %vm501, %v751
        %784 = vst.msk [vmem:[#allocation3 + $0xd0] sm:$0xff] %vm501, %v752
        %785 = vst.msk [vmem:[#allocation3 + $0xd8] sm:$0xff] %vm501, %v753
        %786 = vst.msk [vmem:[#allocation3 + $0xe0] sm:$0xff] %vm501, %v754
        %787 = vst.msk [vmem:[#allocation3 + $0xe8] sm:$0xff] %vm501, %v755
        %788 = vst.msk [vmem:[#allocation3 + $0xf0] sm:$0xff] %vm501, %v756
        %789 = vst.msk [vmem:[#allocation3 + $0xf8] sm:$0xff] %vm501, %v757
        // Predicated region
        $region41: #{tpu_custom_call.1} parent=31 // pred_check
          %p790 = pneg %p208
        $region42: #{tpu_custom_call.1} parent=31 // pred_check_branch
          %792 = sbr.rel (%p790) target = $region44
        $region43: #{tpu_custom_call.1} parent=31 // pred_region
          %v793 = vld [vmem:[#allocation2] sm:$0xff]
          %v794 = vld [vmem:[#allocation2 + $0x8] sm:$0xff]
          %v795 = vld [vmem:[#allocation2 + $0x10] sm:$0xff]
          %v796 = vld [vmem:[#allocation2 + $0x18] sm:$0xff]
          %v797 = vld [vmem:[#allocation2 + $0x20] sm:$0xff]
          %v798 = vld [vmem:[#allocation2 + $0x28] sm:$0xff]
          %v799 = vld [vmem:[#allocation2 + $0x30] sm:$0xff]
          %v800 = vld [vmem:[#allocation2 + $0x38] sm:$0xff]
          %v801 = vld [vmem:[#allocation2 + $0x40] sm:$0xff]
          %v802 = vld [vmem:[#allocation2 + $0x48] sm:$0xff]
          %v803 = vld [vmem:[#allocation2 + $0x50] sm:$0xff]
          %v804 = vld [vmem:[#allocation2 + $0x58] sm:$0xff]
          %v805 = vld [vmem:[#allocation2 + $0x60] sm:$0xff]
          %v806 = vld [vmem:[#allocation2 + $0x68] sm:$0xff]
          %v807 = vld [vmem:[#allocation2 + $0x70] sm:$0xff]
          %v808 = vld [vmem:[#allocation2 + $0x78] sm:$0xff]
          %v809 = vld [vmem:[#allocation2 + $0x80] sm:$0xff]
          %v810 = vld [vmem:[#allocation2 + $0x88] sm:$0xff]
          %v811 = vld [vmem:[#allocation2 + $0x90] sm:$0xff]
          %v812 = vld [vmem:[#allocation2 + $0x98] sm:$0xff]
          %v813 = vld [vmem:[#allocation2 + $0xa0] sm:$0xff]
          %v814 = vld [vmem:[#allocation2 + $0xa8] sm:$0xff]
          %v815 = vld [vmem:[#allocation2 + $0xb0] sm:$0xff]
          %v816 = vld [vmem:[#allocation2 + $0xb8] sm:$0xff]
          %v817 = vld [vmem:[#allocation2 + $0xc0] sm:$0xff]
          %v818 = vld [vmem:[#allocation2 + $0xc8] sm:$0xff]
          %v819 = vld [vmem:[#allocation2 + $0xd0] sm:$0xff]
          %v820 = vld [vmem:[#allocation2 + $0xd8] sm:$0xff]
          %v821 = vld [vmem:[#allocation2 + $0xe0] sm:$0xff]
          %v822 = vld [vmem:[#allocation2 + $0xe8] sm:$0xff]
          %v823 = vld [vmem:[#allocation2 + $0xf0] sm:$0xff]
          %v824 = vld [vmem:[#allocation2 + $0xf8] sm:$0xff]
          %v825 = vsel %vm501, %v793, 0.0
          %v826 = vrot.slane %v825, 4
          %v827 = vadd.f32 %v825, %v826
          %v828 = vrot.slane %v827, 2
          %v829 = vadd.f32 %v827, %v828
          %v830 = vrot.slane %v829, 1
          %v831 = vadd.f32 %v829, %v830
          %v832 = vsel %vm501, %v794, 0.0
          %v833 = vrot.slane %v832, 4
          %v834 = vadd.f32 %v832, %v833
          %v835 = vrot.slane %v834, 2
          %v836 = vadd.f32 %v834, %v835
          %v837 = vrot.slane %v836, 1
          %v838 = vadd.f32 %v836, %v837
          %v839 = vsel %vm501, %v795, 0.0
          %v840 = vrot.slane %v839, 4
          %v841 = vadd.f32 %v839, %v840
          %v842 = vrot.slane %v841, 2
          %v843 = vadd.f32 %v841, %v842
          %v844 = vrot.slane %v843, 1
          %v845 = vadd.f32 %v843, %v844
          %v846 = vsel %vm501, %v796, 0.0
          %v847 = vrot.slane %v846, 4
          %v848 = vadd.f32 %v846, %v847
          %v849 = vrot.slane %v848, 2
          %v850 = vadd.f32 %v848, %v849
          %v851 = vrot.slane %v850, 1
          %v852 = vadd.f32 %v850, %v851
          %v853 = vsel %vm501, %v797, 0.0
          %v854 = vrot.slane %v853, 4
          %v855 = vadd.f32 %v853, %v854
          %v856 = vrot.slane %v855, 2
          %v857 = vadd.f32 %v855, %v856
          %v858 = vrot.slane %v857, 1
          %v859 = vadd.f32 %v857, %v858
          %v860 = vsel %vm501, %v798, 0.0
          %v861 = vrot.slane %v860, 4
          %v862 = vadd.f32 %v860, %v861
          %v863 = vrot.slane %v862, 2
          %v864 = vadd.f32 %v862, %v863
          %v865 = vrot.slane %v864, 1
          %v866 = vadd.f32 %v864, %v865
          %v867 = vsel %vm501, %v799, 0.0
          %v868 = vrot.slane %v867, 4
          %v869 = vadd.f32 %v867, %v868
          %v870 = vrot.slane %v869, 2
          %v871 = vadd.f32 %v869, %v870
          %v872 = vrot.slane %v871, 1
          %v873 = vadd.f32 %v871, %v872
          %v874 = vsel %vm501, %v800, 0.0
          %v875 = vrot.slane %v874, 4
          %v876 = vadd.f32 %v874, %v875
          %v877 = vrot.slane %v876, 2
          %v878 = vadd.f32 %v876, %v877
          %v879 = vrot.slane %v878, 1
          %v880 = vadd.f32 %v878, %v879
          %v881 = vsel %vm501, %v801, 0.0
          %v882 = vrot.slane %v881, 4
          %v883 = vadd.f32 %v881, %v882
          %v884 = vrot.slane %v883, 2
          %v885 = vadd.f32 %v883, %v884
          %v886 = vrot.slane %v885, 1
          %v887 = vadd.f32 %v885, %v886
          %v888 = vsel %vm501, %v802, 0.0
          %v889 = vrot.slane %v888, 4
          %v890 = vadd.f32 %v888, %v889
          %v891 = vrot.slane %v890, 2
          %v892 = vadd.f32 %v890, %v891
          %v893 = vrot.slane %v892, 1
          %v894 = vadd.f32 %v892, %v893
          %v895 = vsel %vm501, %v803, 0.0
          %v896 = vrot.slane %v895, 4
          %v897 = vadd.f32 %v895, %v896
          %v898 = vrot.slane %v897, 2
          %v899 = vadd.f32 %v897, %v898
          %v900 = vrot.slane %v899, 1
          %v901 = vadd.f32 %v899, %v900
          %v902 = vsel %vm501, %v804, 0.0
          %v903 = vrot.slane %v902, 4
          %v904 = vadd.f32 %v902, %v903
          %v905 = vrot.slane %v904, 2
          %v906 = vadd.f32 %v904, %v905
          %v907 = vrot.slane %v906, 1
          %v908 = vadd.f32 %v906, %v907
          %v909 = vsel %vm501, %v805, 0.0
          %v910 = vrot.slane %v909, 4
          %v911 = vadd.f32 %v909, %v910
          %v912 = vrot.slane %v911, 2
          %v913 = vadd.f32 %v911, %v912
          %v914 = vrot.slane %v913, 1
          %v915 = vadd.f32 %v913, %v914
          %v916 = vsel %vm501, %v806, 0.0
          %v917 = vrot.slane %v916, 4
          %v918 = vadd.f32 %v916, %v917
          %v919 = vrot.slane %v918, 2
          %v920 = vadd.f32 %v918, %v919
          %v921 = vrot.slane %v920, 1
          %v922 = vadd.f32 %v920, %v921
          %v923 = vsel %vm501, %v807, 0.0
          %v924 = vrot.slane %v923, 4
          %v925 = vadd.f32 %v923, %v924
          %v926 = vrot.slane %v925, 2
          %v927 = vadd.f32 %v925, %v926
          %v928 = vrot.slane %v927, 1
          %v929 = vadd.f32 %v927, %v928
          %v930 = vsel %vm501, %v808, 0.0
          %v931 = vrot.slane %v930, 4
          %v932 = vadd.f32 %v930, %v931
          %v933 = vrot.slane %v932, 2
          %v934 = vadd.f32 %v932, %v933
          %v935 = vrot.slane %v934, 1
          %v936 = vadd.f32 %v934, %v935
          %v937 = vsel %vm501, %v809, 0.0
          %v938 = vrot.slane %v937, 4
          %v939 = vadd.f32 %v937, %v938
          %v940 = vrot.slane %v939, 2
          %v941 = vadd.f32 %v939, %v940
          %v942 = vrot.slane %v941, 1
          %v943 = vadd.f32 %v941, %v942
          %v944 = vsel %vm501, %v810, 0.0
          %v945 = vrot.slane %v944, 4
          %v946 = vadd.f32 %v944, %v945
          %v947 = vrot.slane %v946, 2
          %v948 = vadd.f32 %v946, %v947
          %v949 = vrot.slane %v948, 1
          %v950 = vadd.f32 %v948, %v949
          %v951 = vsel %vm501, %v811, 0.0
          %v952 = vrot.slane %v951, 4
          %v953 = vadd.f32 %v951, %v952
          %v954 = vrot.slane %v953, 2
          %v955 = vadd.f32 %v953, %v954
          %v956 = vrot.slane %v955, 1
          %v957 = vadd.f32 %v955, %v956
          %v958 = vsel %vm501, %v812, 0.0
          %v959 = vrot.slane %v958, 4
          %v960 = vadd.f32 %v958, %v959
          %v961 = vrot.slane %v960, 2
          %v962 = vadd.f32 %v960, %v961
          %v963 = vrot.slane %v962, 1
          %v964 = vadd.f32 %v962, %v963
          %v965 = vsel %vm501, %v813, 0.0
          %v966 = vrot.slane %v965, 4
          %v967 = vadd.f32 %v965, %v966
          %v968 = vrot.slane %v967, 2
          %v969 = vadd.f32 %v967, %v968
          %v970 = vrot.slane %v969, 1
          %v971 = vadd.f32 %v969, %v970
          %v972 = vsel %vm501, %v814, 0.0
          %v973 = vrot.slane %v972, 4
          %v974 = vadd.f32 %v972, %v973
          %v975 = vrot.slane %v974, 2
          %v976 = vadd.f32 %v974, %v975
          %v977 = vrot.slane %v976, 1
          %v978 = vadd.f32 %v976, %v977
          %v979 = vsel %vm501, %v815, 0.0
          %v980 = vrot.slane %v979, 4
          %v981 = vadd.f32 %v979, %v980
          %v982 = vrot.slane %v981, 2
          %v983 = vadd.f32 %v981, %v982
          %v984 = vrot.slane %v983, 1
          %v985 = vadd.f32 %v983, %v984
          %v986 = vsel %vm501, %v816, 0.0
          %v987 = vrot.slane %v986, 4
          %v988 = vadd.f32 %v986, %v987
          %v989 = vrot.slane %v988, 2
          %v990 = vadd.f32 %v988, %v989
          %v991 = vrot.slane %v990, 1
          %v992 = vadd.f32 %v990, %v991
          %v993 = vsel %vm501, %v817, 0.0
          %v994 = vrot.slane %v993, 4
          %v995 = vadd.f32 %v993, %v994
          %v996 = vrot.slane %v995, 2
          %v997 = vadd.f32 %v995, %v996
          %v998 = vrot.slane %v997, 1
          %v999 = vadd.f32 %v997, %v998
          %v1000 = vsel %vm501, %v818, 0.0
          %v1001 = vrot.slane %v1000, 4
          %v1002 = vadd.f32 %v1000, %v1001
          %v1003 = vrot.slane %v1002, 2
          %v1004 = vadd.f32 %v1002, %v1003
          %v1005 = vrot.slane %v1004, 1
          %v1006 = vadd.f32 %v1004, %v1005
          %v1007 = vsel %vm501, %v819, 0.0
          %v1008 = vrot.slane %v1007, 4
          %v1009 = vadd.f32 %v1007, %v1008
          %v1010 = vrot.slane %v1009, 2
          %v1011 = vadd.f32 %v1009, %v1010
          %v1012 = vrot.slane %v1011, 1
          %v1013 = vadd.f32 %v1011, %v1012
          %v1014 = vsel %vm501, %v820, 0.0
          %v1015 = vrot.slane %v1014, 4
          %v1016 = vadd.f32 %v1014, %v1015
          %v1017 = vrot.slane %v1016, 2
          %v1018 = vadd.f32 %v1016, %v1017
          %v1019 = vrot.slane %v1018, 1
          %v1020 = vadd.f32 %v1018, %v1019
          %v1021 = vsel %vm501, %v821, 0.0
          %v1022 = vrot.slane %v1021, 4
          %v1023 = vadd.f32 %v1021, %v1022
          %v1024 = vrot.slane %v1023, 2
          %v1025 = vadd.f32 %v1023, %v1024
          %v1026 = vrot.slane %v1025, 1
          %v1027 = vadd.f32 %v1025, %v1026
          %v1028 = vsel %vm501, %v822, 0.0
          %v1029 = vrot.slane %v1028, 4
          %v1030 = vadd.f32 %v1028, %v1029
          %v1031 = vrot.slane %v1030, 2
          %v1032 = vadd.f32 %v1030, %v1031
          %v1033 = vrot.slane %v1032, 1
          %v1034 = vadd.f32 %v1032, %v1033
          %v1035 = vsel %vm501, %v823, 0.0
          %v1036 = vrot.slane %v1035, 4
          %v1037 = vadd.f32 %v1035, %v1036
          %v1038 = vrot.slane %v1037, 2
          %v1039 = vadd.f32 %v1037, %v1038
          %v1040 = vrot.slane %v1039, 1
          %v1041 = vadd.f32 %v1039, %v1040
          %v1042 = vsel %vm501, %v824, 0.0
          %v1043 = vrot.slane %v1042, 4
          %v1044 = vadd.f32 %v1042, %v1043
          %v1045 = vrot.slane %v1044, 2
          %v1046 = vadd.f32 %v1044, %v1045
          %v1047 = vrot.slane %v1046, 1
          %v1048 = vadd.f32 %v1046, %v1047
          %v1049 = vld [vmem:[#allocation3] sm:$0xff]
          %v1050 = vld [vmem:[#allocation3 + $0x8] sm:$0xff]
          %v1051 = vld [vmem:[#allocation3 + $0x10] sm:$0xff]
          %v1052 = vld [vmem:[#allocation3 + $0x18] sm:$0xff]
          %v1053 = vld [vmem:[#allocation3 + $0x20] sm:$0xff]
          %v1054 = vld [vmem:[#allocation3 + $0x28] sm:$0xff]
          %v1055 = vld [vmem:[#allocation3 + $0x30] sm:$0xff]
          %v1056 = vld [vmem:[#allocation3 + $0x38] sm:$0xff]
          %v1057 = vld [vmem:[#allocation3 + $0x40] sm:$0xff]
          %v1058 = vld [vmem:[#allocation3 + $0x48] sm:$0xff]
          %v1059 = vld [vmem:[#allocation3 + $0x50] sm:$0xff]
          %v1060 = vld [vmem:[#allocation3 + $0x58] sm:$0xff]
          %v1061 = vld [vmem:[#allocation3 + $0x60] sm:$0xff]
          %v1062 = vld [vmem:[#allocation3 + $0x68] sm:$0xff]
          %v1063 = vld [vmem:[#allocation3 + $0x70] sm:$0xff]
          %v1064 = vld [vmem:[#allocation3 + $0x78] sm:$0xff]
          %v1065 = vld [vmem:[#allocation3 + $0x80] sm:$0xff]
          %v1066 = vld [vmem:[#allocation3 + $0x88] sm:$0xff]
          %v1067 = vld [vmem:[#allocation3 + $0x90] sm:$0xff]
          %v1068 = vld [vmem:[#allocation3 + $0x98] sm:$0xff]
          %v1069 = vld [vmem:[#allocation3 + $0xa0] sm:$0xff]
          %v1070 = vld [vmem:[#allocation3 + $0xa8] sm:$0xff]
          %v1071 = vld [vmem:[#allocation3 + $0xb0] sm:$0xff]
          %v1072 = vld [vmem:[#allocation3 + $0xb8] sm:$0xff]
          %v1073 = vld [vmem:[#allocation3 + $0xc0] sm:$0xff]
          %v1074 = vld [vmem:[#allocation3 + $0xc8] sm:$0xff]
          %v1075 = vld [vmem:[#allocation3 + $0xd0] sm:$0xff]
          %v1076 = vld [vmem:[#allocation3 + $0xd8] sm:$0xff]
          %v1077 = vld [vmem:[#allocation3 + $0xe0] sm:$0xff]
          %v1078 = vld [vmem:[#allocation3 + $0xe8] sm:$0xff]
          %v1079 = vld [vmem:[#allocation3 + $0xf0] sm:$0xff]
          %v1080 = vld [vmem:[#allocation3 + $0xf8] sm:$0xff]
          %v1081 = vsel %vm501, %v1049, 0.0
          %v1082 = vrot.slane %v1081, 4
          %v1083 = vadd.f32 %v1081, %v1082
          %v1084 = vrot.slane %v1083, 2
          %v1085 = vadd.f32 %v1083, %v1084
          %v1086 = vrot.slane %v1085, 1
          %v1087 = vadd.f32 %v1085, %v1086
          %v1088 = vsel %vm501, %v1050, 0.0
          %v1089 = vrot.slane %v1088, 4
          %v1090 = vadd.f32 %v1088, %v1089
          %v1091 = vrot.slane %v1090, 2
          %v1092 = vadd.f32 %v1090, %v1091
          %v1093 = vrot.slane %v1092, 1
          %v1094 = vadd.f32 %v1092, %v1093
          %v1095 = vsel %vm501, %v1051, 0.0
          %v1096 = vrot.slane %v1095, 4
          %v1097 = vadd.f32 %v1095, %v1096
          %v1098 = vrot.slane %v1097, 2
          %v1099 = vadd.f32 %v1097, %v1098
          %v1100 = vrot.slane %v1099, 1
          %v1101 = vadd.f32 %v1099, %v1100
          %v1102 = vsel %vm501, %v1052, 0.0
          %v1103 = vrot.slane %v1102, 4
          %v1104 = vadd.f32 %v1102, %v1103
          %v1105 = vrot.slane %v1104, 2
          %v1106 = vadd.f32 %v1104, %v1105
          %v1107 = vrot.slane %v1106, 1
          %v1108 = vadd.f32 %v1106, %v1107
          %v1109 = vsel %vm501, %v1053, 0.0
          %v1110 = vrot.slane %v1109, 4
          %v1111 = vadd.f32 %v1109, %v1110
          %v1112 = vrot.slane %v1111, 2
          %v1113 = vadd.f32 %v1111, %v1112
          %v1114 = vrot.slane %v1113, 1
          %v1115 = vadd.f32 %v1113, %v1114
          %v1116 = vsel %vm501, %v1054, 0.0
          %v1117 = vrot.slane %v1116, 4
          %v1118 = vadd.f32 %v1116, %v1117
          %v1119 = vrot.slane %v1118, 2
          %v1120 = vadd.f32 %v1118, %v1119
          %v1121 = vrot.slane %v1120, 1
          %v1122 = vadd.f32 %v1120, %v1121
          %v1123 = vsel %vm501, %v1055, 0.0
          %v1124 = vrot.slane %v1123, 4
          %v1125 = vadd.f32 %v1123, %v1124
          %v1126 = vrot.slane %v1125, 2
          %v1127 = vadd.f32 %v1125, %v1126
          %v1128 = vrot.slane %v1127, 1
          %v1129 = vadd.f32 %v1127, %v1128
          %v1130 = vsel %vm501, %v1056, 0.0
          %v1131 = vrot.slane %v1130, 4
          %v1132 = vadd.f32 %v1130, %v1131
          %v1133 = vrot.slane %v1132, 2
          %v1134 = vadd.f32 %v1132, %v1133
          %v1135 = vrot.slane %v1134, 1
          %v1136 = vadd.f32 %v1134, %v1135
          %v1137 = vsel %vm501, %v1057, 0.0
          %v1138 = vrot.slane %v1137, 4
          %v1139 = vadd.f32 %v1137, %v1138
          %v1140 = vrot.slane %v1139, 2
          %v1141 = vadd.f32 %v1139, %v1140
          %v1142 = vrot.slane %v1141, 1
          %v1143 = vadd.f32 %v1141, %v1142
          %v1144 = vsel %vm501, %v1058, 0.0
          %v1145 = vrot.slane %v1144, 4
          %v1146 = vadd.f32 %v1144, %v1145
          %v1147 = vrot.slane %v1146, 2
          %v1148 = vadd.f32 %v1146, %v1147
          %v1149 = vrot.slane %v1148, 1
          %v1150 = vadd.f32 %v1148, %v1149
          %v1151 = vsel %vm501, %v1059, 0.0
          %v1152 = vrot.slane %v1151, 4
          %v1153 = vadd.f32 %v1151, %v1152
          %v1154 = vrot.slane %v1153, 2
          %v1155 = vadd.f32 %v1153, %v1154
          %v1156 = vrot.slane %v1155, 1
          %v1157 = vadd.f32 %v1155, %v1156
          %v1158 = vsel %vm501, %v1060, 0.0
          %v1159 = vrot.slane %v1158, 4
          %v1160 = vadd.f32 %v1158, %v1159
          %v1161 = vrot.slane %v1160, 2
          %v1162 = vadd.f32 %v1160, %v1161
          %v1163 = vrot.slane %v1162, 1
          %v1164 = vadd.f32 %v1162, %v1163
          %v1165 = vsel %vm501, %v1061, 0.0
          %v1166 = vrot.slane %v1165, 4
          %v1167 = vadd.f32 %v1165, %v1166
          %v1168 = vrot.slane %v1167, 2
          %v1169 = vadd.f32 %v1167, %v1168
          %v1170 = vrot.slane %v1169, 1
          %v1171 = vadd.f32 %v1169, %v1170
          %v1172 = vsel %vm501, %v1062, 0.0
          %v1173 = vrot.slane %v1172, 4
          %v1174 = vadd.f32 %v1172, %v1173
          %v1175 = vrot.slane %v1174, 2
          %v1176 = vadd.f32 %v1174, %v1175
          %v1177 = vrot.slane %v1176, 1
          %v1178 = vadd.f32 %v1176, %v1177
          %v1179 = vsel %vm501, %v1063, 0.0
          %v1180 = vrot.slane %v1179, 4
          %v1181 = vadd.f32 %v1179, %v1180
          %v1182 = vrot.slane %v1181, 2
          %v1183 = vadd.f32 %v1181, %v1182
          %v1184 = vrot.slane %v1183, 1
          %v1185 = vadd.f32 %v1183, %v1184
          %v1186 = vsel %vm501, %v1064, 0.0
          %v1187 = vrot.slane %v1186, 4
          %v1188 = vadd.f32 %v1186, %v1187
          %v1189 = vrot.slane %v1188, 2
          %v1190 = vadd.f32 %v1188, %v1189
          %v1191 = vrot.slane %v1190, 1
          %v1192 = vadd.f32 %v1190, %v1191
          %v1193 = vsel %vm501, %v1065, 0.0
          %v1194 = vrot.slane %v1193, 4
          %v1195 = vadd.f32 %v1193, %v1194
          %v1196 = vrot.slane %v1195, 2
          %v1197 = vadd.f32 %v1195, %v1196
          %v1198 = vrot.slane %v1197, 1
          %v1199 = vadd.f32 %v1197, %v1198
          %v1200 = vsel %vm501, %v1066, 0.0
          %v1201 = vrot.slane %v1200, 4
          %v1202 = vadd.f32 %v1200, %v1201
          %v1203 = vrot.slane %v1202, 2
          %v1204 = vadd.f32 %v1202, %v1203
          %v1205 = vrot.slane %v1204, 1
          %v1206 = vadd.f32 %v1204, %v1205
          %v1207 = vsel %vm501, %v1067, 0.0
          %v1208 = vrot.slane %v1207, 4
          %v1209 = vadd.f32 %v1207, %v1208
          %v1210 = vrot.slane %v1209, 2
          %v1211 = vadd.f32 %v1209, %v1210
          %v1212 = vrot.slane %v1211, 1
          %v1213 = vadd.f32 %v1211, %v1212
          %v1214 = vsel %vm501, %v1068, 0.0
          %v1215 = vrot.slane %v1214, 4
          %v1216 = vadd.f32 %v1214, %v1215
          %v1217 = vrot.slane %v1216, 2
          %v1218 = vadd.f32 %v1216, %v1217
          %v1219 = vrot.slane %v1218, 1
          %v1220 = vadd.f32 %v1218, %v1219
          %v1221 = vsel %vm501, %v1069, 0.0
          %v1222 = vrot.slane %v1221, 4
          %v1223 = vadd.f32 %v1221, %v1222
          %v1224 = vrot.slane %v1223, 2
          %v1225 = vadd.f32 %v1223, %v1224
          %v1226 = vrot.slane %v1225, 1
          %v1227 = vadd.f32 %v1225, %v1226
          %v1228 = vsel %vm501, %v1070, 0.0
          %v1229 = vrot.slane %v1228, 4
          %v1230 = vadd.f32 %v1228, %v1229
          %v1231 = vrot.slane %v1230, 2
          %v1232 = vadd.f32 %v1230, %v1231
          %v1233 = vrot.slane %v1232, 1
          %v1234 = vadd.f32 %v1232, %v1233
          %v1235 = vsel %vm501, %v1071, 0.0
          %v1236 = vrot.slane %v1235, 4
          %v1237 = vadd.f32 %v1235, %v1236
          %v1238 = vrot.slane %v1237, 2
          %v1239 = vadd.f32 %v1237, %v1238
          %v1240 = vrot.slane %v1239, 1
          %v1241 = vadd.f32 %v1239, %v1240
          %v1242 = vsel %vm501, %v1072, 0.0
          %v1243 = vrot.slane %v1242, 4
          %v1244 = vadd.f32 %v1242, %v1243
          %v1245 = vrot.slane %v1244, 2
          %v1246 = vadd.f32 %v1244, %v1245
          %v1247 = vrot.slane %v1246, 1
          %v1248 = vadd.f32 %v1246, %v1247
          %v1249 = vsel %vm501, %v1073, 0.0
          %v1250 = vrot.slane %v1249, 4
          %v1251 = vadd.f32 %v1249, %v1250
          %v1252 = vrot.slane %v1251, 2
          %v1253 = vadd.f32 %v1251, %v1252
          %v1254 = vrot.slane %v1253, 1
          %v1255 = vadd.f32 %v1253, %v1254
          %v1256 = vsel %vm501, %v1074, 0.0
          %v1257 = vrot.slane %v1256, 4
          %v1258 = vadd.f32 %v1256, %v1257
          %v1259 = vrot.slane %v1258, 2
          %v1260 = vadd.f32 %v1258, %v1259
          %v1261 = vrot.slane %v1260, 1
          %v1262 = vadd.f32 %v1260, %v1261
          %v1263 = vsel %vm501, %v1075, 0.0
          %v1264 = vrot.slane %v1263, 4
          %v1265 = vadd.f32 %v1263, %v1264
          %v1266 = vrot.slane %v1265, 2
          %v1267 = vadd.f32 %v1265, %v1266
          %v1268 = vrot.slane %v1267, 1
          %v1269 = vadd.f32 %v1267, %v1268
          %v1270 = vsel %vm501, %v1076, 0.0
          %v1271 = vrot.slane %v1270, 4
          %v1272 = vadd.f32 %v1270, %v1271
          %v1273 = vrot.slane %v1272, 2
          %v1274 = vadd.f32 %v1272, %v1273
          %v1275 = vrot.slane %v1274, 1
          %v1276 = vadd.f32 %v1274, %v1275
          %v1277 = vsel %vm501, %v1077, 0.0
          %v1278 = vrot.slane %v1277, 4
          %v1279 = vadd.f32 %v1277, %v1278
          %v1280 = vrot.slane %v1279, 2
          %v1281 = vadd.f32 %v1279, %v1280
          %v1282 = vrot.slane %v1281, 1
          %v1283 = vadd.f32 %v1281, %v1282
          %v1284 = vsel %vm501, %v1078, 0.0
          %v1285 = vrot.slane %v1284, 4
          %v1286 = vadd.f32 %v1284, %v1285
          %v1287 = vrot.slane %v1286, 2
          %v1288 = vadd.f32 %v1286, %v1287
          %v1289 = vrot.slane %v1288, 1
          %v1290 = vadd.f32 %v1288, %v1289
          %v1291 = vsel %vm501, %v1079, 0.0
          %v1292 = vrot.slane %v1291, 4
          %v1293 = vadd.f32 %v1291, %v1292
          %v1294 = vrot.slane %v1293, 2
          %v1295 = vadd.f32 %v1293, %v1294
          %v1296 = vrot.slane %v1295, 1
          %v1297 = vadd.f32 %v1295, %v1296
          %v1298 = vsel %vm501, %v1080, 0.0
          %v1299 = vrot.slane %v1298, 4
          %v1300 = vadd.f32 %v1298, %v1299
          %v1301 = vrot.slane %v1300, 2
          %v1302 = vadd.f32 %v1300, %v1301
          %v1303 = vrot.slane %v1302, 1
          %v1304 = vadd.f32 %v1302, %v1303
          %v1305 = vrcp.pop 2048.0
          %v1306 = vmul.f32 %v831, %v1305
          %v1307 = vmul.f32 %v838, %v1305
          %v1308 = vmul.f32 %v845, %v1305
          %v1309 = vmul.f32 %v852, %v1305
          %v1310 = vmul.f32 %v859, %v1305
          %v1311 = vmul.f32 %v866, %v1305
          %v1312 = vmul.f32 %v873, %v1305
          %v1313 = vmul.f32 %v880, %v1305
          %v1314 = vmul.f32 %v887, %v1305
          %v1315 = vmul.f32 %v894, %v1305
          %v1316 = vmul.f32 %v901, %v1305
          %v1317 = vmul.f32 %v908, %v1305
          %v1318 = vmul.f32 %v915, %v1305
          %v1319 = vmul.f32 %v922, %v1305
          %v1320 = vmul.f32 %v929, %v1305
          %v1321 = vmul.f32 %v936, %v1305
          %v1322 = vmul.f32 %v943, %v1305
          %v1323 = vmul.f32 %v950, %v1305
          %v1324 = vmul.f32 %v957, %v1305
          %v1325 = vmul.f32 %v964, %v1305
          %v1326 = vmul.f32 %v971, %v1305
          %v1327 = vmul.f32 %v978, %v1305
          %v1328 = vmul.f32 %v985, %v1305
          %v1329 = vmul.f32 %v992, %v1305
          %v1330 = vmul.f32 %v999, %v1305
          %v1331 = vmul.f32 %v1006, %v1305
          %v1332 = vmul.f32 %v1013, %v1305
          %v1333 = vmul.f32 %v1020, %v1305
          %v1334 = vmul.f32 %v1027, %v1305
          %v1335 = vmul.f32 %v1034, %v1305
          %v1336 = vmul.f32 %v1041, %v1305
          %v1337 = vmul.f32 %v1048, %v1305
          %v1338 = vmul.f32 %v1087, %v1305
          %v1339 = vmul.f32 %v1094, %v1305
          %v1340 = vmul.f32 %v1101, %v1305
          %v1341 = vmul.f32 %v1108, %v1305
          %v1342 = vmul.f32 %v1115, %v1305
          %v1343 = vmul.f32 %v1122, %v1305
          %v1344 = vmul.f32 %v1129, %v1305
          %v1345 = vmul.f32 %v1136, %v1305
          %v1346 = vmul.f32 %v1143, %v1305
          %v1347 = vmul.f32 %v1150, %v1305
          %v1348 = vmul.f32 %v1157, %v1305
          %v1349 = vmul.f32 %v1164, %v1305
          %v1350 = vmul.f32 %v1171, %v1305
          %v1351 = vmul.f32 %v1178, %v1305
          %v1352 = vmul.f32 %v1185, %v1305
          %v1353 = vmul.f32 %v1192, %v1305
          %v1354 = vmul.f32 %v1199, %v1305
          %v1355 = vmul.f32 %v1206, %v1305
          %v1356 = vmul.f32 %v1213, %v1305
          %v1357 = vmul.f32 %v1220, %v1305
          %v1358 = vmul.f32 %v1227, %v1305
          %v1359 = vmul.f32 %v1234, %v1305
          %v1360 = vmul.f32 %v1241, %v1305
          %v1361 = vmul.f32 %v1248, %v1305
          %v1362 = vmul.f32 %v1255, %v1305
          %v1363 = vmul.f32 %v1262, %v1305
          %v1364 = vmul.f32 %v1269, %v1305
          %v1365 = vmul.f32 %v1276, %v1305
          %v1366 = vmul.f32 %v1283, %v1305
          %v1367 = vmul.f32 %v1290, %v1305
          %v1368 = vmul.f32 %v1297, %v1305
          %v1369 = vmul.f32 %v1304, %v1305
          %v1370 = vmul.f32 %v1306, %v1306
          %v1371 = vmul.f32 %v1307, %v1307
          %v1372 = vmul.f32 %v1308, %v1308
          %v1373 = vmul.f32 %v1309, %v1309
          %v1374 = vmul.f32 %v1310, %v1310
          %v1375 = vmul.f32 %v1311, %v1311
          %v1376 = vmul.f32 %v1312, %v1312
          %v1377 = vmul.f32 %v1313, %v1313
          %v1378 = vmul.f32 %v1314, %v1314
          %v1379 = vmul.f32 %v1315, %v1315
          %v1380 = vmul.f32 %v1316, %v1316
          %v1381 = vmul.f32 %v1317, %v1317
          %v1382 = vmul.f32 %v1318, %v1318
          %v1383 = vmul.f32 %v1319, %v1319
          %v1384 = vmul.f32 %v1320, %v1320
          %v1385 = vmul.f32 %v1321, %v1321
          %v1386 = vmul.f32 %v1322, %v1322
          %v1387 = vmul.f32 %v1323, %v1323
          %v1388 = vmul.f32 %v1324, %v1324
          %v1389 = vmul.f32 %v1325, %v1325
          %v1390 = vmul.f32 %v1326, %v1326
          %v1391 = vmul.f32 %v1327, %v1327
          %v1392 = vmul.f32 %v1328, %v1328
          %v1393 = vmul.f32 %v1329, %v1329
          %v1394 = vmul.f32 %v1330, %v1330
          %v1395 = vmul.f32 %v1331, %v1331
          %v1396 = vmul.f32 %v1332, %v1332
          %v1397 = vmul.f32 %v1333, %v1333
          %v1398 = vmul.f32 %v1334, %v1334
          %v1399 = vmul.f32 %v1335, %v1335
          %v1400 = vmul.f32 %v1336, %v1336
          %v1401 = vmul.f32 %v1337, %v1337
          %v1402 = vsub.f32 %v1338, %v1370
          %v1403 = vsub.f32 %v1339, %v1371
          %v1404 = vsub.f32 %v1340, %v1372
          %v1405 = vsub.f32 %v1341, %v1373
          %v1406 = vsub.f32 %v1342, %v1374
          %v1407 = vsub.f32 %v1343, %v1375
          %v1408 = vsub.f32 %v1344, %v1376
          %v1409 = vsub.f32 %v1345, %v1377
          %v1410 = vsub.f32 %v1346, %v1378
          %v1411 = vsub.f32 %v1347, %v1379
          %v1412 = vsub.f32 %v1348, %v1380
          %v1413 = vsub.f32 %v1349, %v1381
          %v1414 = vsub.f32 %v1350, %v1382
          %v1415 = vsub.f32 %v1351, %v1383
          %v1416 = vsub.f32 %v1352, %v1384
          %v1417 = vsub.f32 %v1353, %v1385
          %v1418 = vsub.f32 %v1354, %v1386
          %v1419 = vsub.f32 %v1355, %v1387
          %v1420 = vsub.f32 %v1356, %v1388
          %v1421 = vsub.f32 %v1357, %v1389
          %v1422 = vsub.f32 %v1358, %v1390
          %v1423 = vsub.f32 %v1359, %v1391
          %v1424 = vsub.f32 %v1360, %v1392
          %v1425 = vsub.f32 %v1361, %v1393
          %v1426 = vsub.f32 %v1362, %v1394
          %v1427 = vsub.f32 %v1363, %v1395
          %v1428 = vsub.f32 %v1364, %v1396
          %v1429 = vsub.f32 %v1365, %v1397
          %v1430 = vsub.f32 %v1366, %v1398
          %v1431 = vsub.f32 %v1367, %v1399
          %v1432 = vsub.f32 %v1368, %v1400
          %v1433 = vsub.f32 %v1369, %v1401
          %v1434 = vadd.f32 %v1402, 1e-06
          %v1435 = vadd.f32 %v1403, 1e-06
          %v1436 = vadd.f32 %v1404, 1e-06
          %v1437 = vadd.f32 %v1405, 1e-06
          %v1438 = vadd.f32 %v1406, 1e-06
          %v1439 = vadd.f32 %v1407, 1e-06
          %v1440 = vadd.f32 %v1408, 1e-06
          %v1441 = vadd.f32 %v1409, 1e-06
          %v1442 = vadd.f32 %v1410, 1e-06
          %v1443 = vadd.f32 %v1411, 1e-06
          %v1444 = vadd.f32 %v1412, 1e-06
          %v1445 = vadd.f32 %v1413, 1e-06
          %v1446 = vadd.f32 %v1414, 1e-06
          %v1447 = vadd.f32 %v1415, 1e-06
          %v1448 = vadd.f32 %v1416, 1e-06
          %v1449 = vadd.f32 %v1417, 1e-06
          %v1450 = vadd.f32 %v1418, 1e-06
          %v1451 = vadd.f32 %v1419, 1e-06
          %v1452 = vadd.f32 %v1420, 1e-06
          %v1453 = vadd.f32 %v1421, 1e-06
          %v1454 = vadd.f32 %v1422, 1e-06
          %v1455 = vadd.f32 %v1423, 1e-06
          %v1456 = vadd.f32 %v1424, 1e-06
          %v1457 = vadd.f32 %v1425, 1e-06
          %v1458 = vadd.f32 %v1426, 1e-06
          %v1459 = vadd.f32 %v1427, 1e-06
          %v1460 = vadd.f32 %v1428, 1e-06
          %v1461 = vadd.f32 %v1429, 1e-06
          %v1462 = vadd.f32 %v1430, 1e-06
          %v1463 = vadd.f32 %v1431, 1e-06
          %v1464 = vadd.f32 %v1432, 1e-06
          %v1465 = vadd.f32 %v1433, 1e-06
          %v1466 = vrsqrt.pop %v1434
          %v1467 = vrsqrt.pop %v1435
          %v1468 = vrsqrt.pop %v1436
          %v1469 = vrsqrt.pop %v1437
          %v1470 = vrsqrt.pop %v1438
          %v1471 = vrsqrt.pop %v1439
          %v1472 = vrsqrt.pop %v1440
          %v1473 = vrsqrt.pop %v1441
          %v1474 = vrsqrt.pop %v1442
          %v1475 = vrsqrt.pop %v1443
          %v1476 = vrsqrt.pop %v1444
          %v1477 = vrsqrt.pop %v1445
          %v1478 = vrsqrt.pop %v1446
          %v1479 = vrsqrt.pop %v1447
          %v1480 = vrsqrt.pop %v1448
          %v1481 = vrsqrt.pop %v1449
          %v1482 = vrsqrt.pop %v1450
          %v1483 = vrsqrt.pop %v1451
          %v1484 = vrsqrt.pop %v1452
          %v1485 = vrsqrt.pop %v1453
          %v1486 = vrsqrt.pop %v1454
          %v1487 = vrsqrt.pop %v1455
          %v1488 = vrsqrt.pop %v1456
          %v1489 = vrsqrt.pop %v1457
          %v1490 = vrsqrt.pop %v1458
          %v1491 = vrsqrt.pop %v1459
          %v1492 = vrsqrt.pop %v1460
          %v1493 = vrsqrt.pop %v1461
          %v1494 = vrsqrt.pop %v1462
          %v1495 = vrsqrt.pop %v1463
          %v1496 = vrsqrt.pop %v1464
          %v1497 = vrsqrt.pop %v1465
          %v1498 = vld [vmem:[%s1] sm:$0xff]
          %v1499 = vld [vmem:[%s1 + $0x8] sm:$0xff]
          %v1500 = vld [vmem:[%s1 + $0x10] sm:$0xff]
          %v1501 = vld [vmem:[%s1 + $0x18] sm:$0xff]
          %v1502 = vld [vmem:[%s1 + $0x20] sm:$0xff]
          %v1503 = vld [vmem:[%s1 + $0x28] sm:$0xff]
          %v1504 = vld [vmem:[%s1 + $0x30] sm:$0xff]
          %v1505 = vld [vmem:[%s1 + $0x38] sm:$0xff]
          %v1506 = vld [vmem:[%s1 + $0x40] sm:$0xff]
          %v1507 = vld [vmem:[%s1 + $0x48] sm:$0xff]
          %v1508 = vld [vmem:[%s1 + $0x50] sm:$0xff]
          %v1509 = vld [vmem:[%s1 + $0x58] sm:$0xff]
          %v1510 = vld [vmem:[%s1 + $0x60] sm:$0xff]
          %v1511 = vld [vmem:[%s1 + $0x68] sm:$0xff]
          %v1512 = vld [vmem:[%s1 + $0x70] sm:$0xff]
          %v1513 = vld [vmem:[%s1 + $0x78] sm:$0xff]
          %v1514 = vld [vmem:[%s1 + $0x80] sm:$0xff]
          %v1515 = vld [vmem:[%s1 + $0x88] sm:$0xff]
          %v1516 = vld [vmem:[%s1 + $0x90] sm:$0xff]
          %v1517 = vld [vmem:[%s1 + $0x98] sm:$0xff]
          %v1518 = vld [vmem:[%s1 + $0xa0] sm:$0xff]
          %v1519 = vld [vmem:[%s1 + $0xa8] sm:$0xff]
          %v1520 = vld [vmem:[%s1 + $0xb0] sm:$0xff]
          %v1521 = vld [vmem:[%s1 + $0xb8] sm:$0xff]
          %v1522 = vld [vmem:[%s1 + $0xc0] sm:$0xff]
          %v1523 = vld [vmem:[%s1 + $0xc8] sm:$0xff]
          %v1524 = vld [vmem:[%s1 + $0xd0] sm:$0xff]
          %v1525 = vld [vmem:[%s1 + $0xd8] sm:$0xff]
          %v1526 = vld [vmem:[%s1 + $0xe0] sm:$0xff]
          %v1527 = vld [vmem:[%s1 + $0xe8] sm:$0xff]
          %v1528 = vld [vmem:[%s1 + $0xf0] sm:$0xff]
          %v1529 = vld [vmem:[%s1 + $0xf8] sm:$0xff]
          %v1530 = vld [vmem:[%s2] sm:$0xff]
          %v1531 = vld [vmem:[%s2 + $0x8] sm:$0xff]
          %v1532 = vld [vmem:[%s2 + $0x10] sm:$0xff]
          %v1533 = vld [vmem:[%s2 + $0x18] sm:$0xff]
          %v1534 = vld [vmem:[%s2 + $0x20] sm:$0xff]
          %v1535 = vld [vmem:[%s2 + $0x28] sm:$0xff]
          %v1536 = vld [vmem:[%s2 + $0x30] sm:$0xff]
          %v1537 = vld [vmem:[%s2 + $0x38] sm:$0xff]
          %v1538 = vld [vmem:[%s2 + $0x40] sm:$0xff]
          %v1539 = vld [vmem:[%s2 + $0x48] sm:$0xff]
          %v1540 = vld [vmem:[%s2 + $0x50] sm:$0xff]
          %v1541 = vld [vmem:[%s2 + $0x58] sm:$0xff]
          %v1542 = vld [vmem:[%s2 + $0x60] sm:$0xff]
          %v1543 = vld [vmem:[%s2 + $0x68] sm:$0xff]
          %v1544 = vld [vmem:[%s2 + $0x70] sm:$0xff]
          %v1545 = vld [vmem:[%s2 + $0x78] sm:$0xff]
          %v1546 = vld [vmem:[%s2 + $0x80] sm:$0xff]
          %v1547 = vld [vmem:[%s2 + $0x88] sm:$0xff]
          %v1548 = vld [vmem:[%s2 + $0x90] sm:$0xff]
          %v1549 = vld [vmem:[%s2 + $0x98] sm:$0xff]
          %v1550 = vld [vmem:[%s2 + $0xa0] sm:$0xff]
          %v1551 = vld [vmem:[%s2 + $0xa8] sm:$0xff]
          %v1552 = vld [vmem:[%s2 + $0xb0] sm:$0xff]
          %v1553 = vld [vmem:[%s2 + $0xb8] sm:$0xff]
          %v1554 = vld [vmem:[%s2 + $0xc0] sm:$0xff]
          %v1555 = vld [vmem:[%s2 + $0xc8] sm:$0xff]
          %v1556 = vld [vmem:[%s2 + $0xd0] sm:$0xff]
          %v1557 = vld [vmem:[%s2 + $0xd8] sm:$0xff]
          %v1558 = vld [vmem:[%s2 + $0xe0] sm:$0xff]
          %v1559 = vld [vmem:[%s2 + $0xe8] sm:$0xff]
          %v1560 = vld [vmem:[%s2 + $0xf0] sm:$0xff]
          %v1561 = vld [vmem:[%s2 + $0xf8] sm:$0xff]
          %v1562 = vmul.f32 %v1498, %v1466
          %v1563 = vmul.f32 %v1499, %v1467
          %v1564 = vmul.f32 %v1500, %v1468
          %v1565 = vmul.f32 %v1501, %v1469
          %v1566 = vmul.f32 %v1502, %v1470
          %v1567 = vmul.f32 %v1503, %v1471
          %v1568 = vmul.f32 %v1504, %v1472
          %v1569 = vmul.f32 %v1505, %v1473
          %v1570 = vmul.f32 %v1506, %v1474
          %v1571 = vmul.f32 %v1507, %v1475
          %v1572 = vmul.f32 %v1508, %v1476
          %v1573 = vmul.f32 %v1509, %v1477
          %v1574 = vmul.f32 %v1510, %v1478
          %v1575 = vmul.f32 %v1511, %v1479
          %v1576 = vmul.f32 %v1512, %v1480
          %v1577 = vmul.f32 %v1513, %v1481
          %v1578 = vmul.f32 %v1514, %v1482
          %v1579 = vmul.f32 %v1515, %v1483
          %v1580 = vmul.f32 %v1516, %v1484
          %v1581 = vmul.f32 %v1517, %v1485
          %v1582 = vmul.f32 %v1518, %v1486
          %v1583 = vmul.f32 %v1519, %v1487
          %v1584 = vmul.f32 %v1520, %v1488
          %v1585 = vmul.f32 %v1521, %v1489
          %v1586 = vmul.f32 %v1522, %v1490
          %v1587 = vmul.f32 %v1523, %v1491
          %v1588 = vmul.f32 %v1524, %v1492
          %v1589 = vmul.f32 %v1525, %v1493
          %v1590 = vmul.f32 %v1526, %v1494
          %v1591 = vmul.f32 %v1527, %v1495
          %v1592 = vmul.f32 %v1528, %v1496
          %v1593 = vmul.f32 %v1529, %v1497
          %v1594 = vmul.f32 %v1306, %v1562
          %v1595 = vmul.f32 %v1307, %v1563
          %v1596 = vmul.f32 %v1308, %v1564
          %v1597 = vmul.f32 %v1309, %v1565
          %v1598 = vmul.f32 %v1310, %v1566
          %v1599 = vmul.f32 %v1311, %v1567
          %v1600 = vmul.f32 %v1312, %v1568
          %v1601 = vmul.f32 %v1313, %v1569
          %v1602 = vmul.f32 %v1314, %v1570
          %v1603 = vmul.f32 %v1315, %v1571
          %v1604 = vmul.f32 %v1316, %v1572
          %v1605 = vmul.f32 %v1317, %v1573
          %v1606 = vmul.f32 %v1318, %v1574
          %v1607 = vmul.f32 %v1319, %v1575
          %v1608 = vmul.f32 %v1320, %v1576
          %v1609 = vmul.f32 %v1321, %v1577
          %v1610 = vmul.f32 %v1322, %v1578
          %v1611 = vmul.f32 %v1323, %v1579
          %v1612 = vmul.f32 %v1324, %v1580
          %v1613 = vmul.f32 %v1325, %v1581
          %v1614 = vmul.f32 %v1326, %v1582
          %v1615 = vmul.f32 %v1327, %v1583
          %v1616 = vmul.f32 %v1328, %v1584
          %v1617 = vmul.f32 %v1329, %v1585
          %v1618 = vmul.f32 %v1330, %v1586
          %v1619 = vmul.f32 %v1331, %v1587
          %v1620 = vmul.f32 %v1332, %v1588
          %v1621 = vmul.f32 %v1333, %v1589
          %v1622 = vmul.f32 %v1334, %v1590
          %v1623 = vmul.f32 %v1335, %v1591
          %v1624 = vmul.f32 %v1336, %v1592
          %v1625 = vmul.f32 %v1337, %v1593
          %v1626 = vsub.f32 %v1530, %v1594
          %v1627 = vsub.f32 %v1531, %v1595
          %v1628 = vsub.f32 %v1532, %v1596
          %v1629 = vsub.f32 %v1533, %v1597
          %v1630 = vsub.f32 %v1534, %v1598
          %v1631 = vsub.f32 %v1535, %v1599
          %v1632 = vsub.f32 %v1536, %v1600
          %v1633 = vsub.f32 %v1537, %v1601
          %v1634 = vsub.f32 %v1538, %v1602
          %v1635 = vsub.f32 %v1539, %v1603
          %v1636 = vsub.f32 %v1540, %v1604
          %v1637 = vsub.f32 %v1541, %v1605
          %v1638 = vsub.f32 %v1542, %v1606
          %v1639 = vsub.f32 %v1543, %v1607
          %v1640 = vsub.f32 %v1544, %v1608
          %v1641 = vsub.f32 %v1545, %v1609
          %v1642 = vsub.f32 %v1546, %v1610
          %v1643 = vsub.f32 %v1547, %v1611
          %v1644 = vsub.f32 %v1548, %v1612
          %v1645 = vsub.f32 %v1549, %v1613
          %v1646 = vsub.f32 %v1550, %v1614
          %v1647 = vsub.f32 %v1551, %v1615
          %v1648 = vsub.f32 %v1552, %v1616
          %v1649 = vsub.f32 %v1553, %v1617
          %v1650 = vsub.f32 %v1554, %v1618
          %v1651 = vsub.f32 %v1555, %v1619
          %v1652 = vsub.f32 %v1556, %v1620
          %v1653 = vsub.f32 %v1557, %v1621
          %v1654 = vsub.f32 %v1558, %v1622
          %v1655 = vsub.f32 %v1559, %v1623
          %v1656 = vsub.f32 %v1560, %v1624
          %v1657 = vsub.f32 %v1561, %v1625
          %1658 = vst.msk [vmem:[%s207] sm:$0xff] %vm501, %v1562
          %1659 = vst.msk [vmem:[%s207 + $0x8] sm:$0xff] %vm501, %v1563
          %1660 = vst.msk [vmem:[%s207 + $0x10] sm:$0xff] %vm501, %v1564
          %1661 = vst.msk [vmem:[%s207 + $0x18] sm:$0xff] %vm501, %v1565
          %1662 = vst.msk [vmem:[%s207 + $0x20] sm:$0xff] %vm501, %v1566
          %1663 = vst.msk [vmem:[%s207 + $0x28] sm:$0xff] %vm501, %v1567
          %1664 = vst.msk [vmem:[%s207 + $0x30] sm:$0xff] %vm501, %v1568
          %1665 = vst.msk [vmem:[%s207 + $0x38] sm:$0xff] %vm501, %v1569
          %1666 = vst.msk [vmem:[%s207 + $0x40] sm:$0xff] %vm501, %v1570
          %1667 = vst.msk [vmem:[%s207 + $0x48] sm:$0xff] %vm501, %v1571
          %1668 = vst.msk [vmem:[%s207 + $0x50] sm:$0xff] %vm501, %v1572
          %1669 = vst.msk [vmem:[%s207 + $0x58] sm:$0xff] %vm501, %v1573
          %1670 = vst.msk [vmem:[%s207 + $0x60] sm:$0xff] %vm501, %v1574
          %1671 = vst.msk [vmem:[%s207 + $0x68] sm:$0xff] %vm501, %v1575
          %1672 = vst.msk [vmem:[%s207 + $0x70] sm:$0xff] %vm501, %v1576
          %1673 = vst.msk [vmem:[%s207 + $0x78] sm:$0xff] %vm501, %v1577
          %1674 = vst.msk [vmem:[%s207 + $0x80] sm:$0xff] %vm501, %v1578
          %1675 = vst.msk [vmem:[%s207 + $0x88] sm:$0xff] %vm501, %v1579
          %1676 = vst.msk [vmem:[%s207 + $0x90] sm:$0xff] %vm501, %v1580
          %1677 = vst.msk [vmem:[%s207 + $0x98] sm:$0xff] %vm501, %v1581
          %1678 = vst.msk [vmem:[%s207 + $0xa0] sm:$0xff] %vm501, %v1582
          %1679 = vst.msk [vmem:[%s207 + $0xa8] sm:$0xff] %vm501, %v1583
          %1680 = vst.msk [vmem:[%s207 + $0xb0] sm:$0xff] %vm501, %v1584
          %1681 = vst.msk [vmem:[%s207 + $0xb8] sm:$0xff] %vm501, %v1585
          %1682 = vst.msk [vmem:[%s207 + $0xc0] sm:$0xff] %vm501, %v1586
          %1683 = vst.msk [vmem:[%s207 + $0xc8] sm:$0xff] %vm501, %v1587
          %1684 = vst.msk [vmem:[%s207 + $0xd0] sm:$0xff] %vm501, %v1588
          %1685 = vst.msk [vmem:[%s207 + $0xd8] sm:$0xff] %vm501, %v1589
          %1686 = vst.msk [vmem:[%s207 + $0xe0] sm:$0xff] %vm501, %v1590
          %1687 = vst.msk [vmem:[%s207 + $0xe8] sm:$0xff] %vm501, %v1591
          %1688 = vst.msk [vmem:[%s207 + $0xf0] sm:$0xff] %vm501, %v1592
          %1689 = vst.msk [vmem:[%s207 + $0xf8] sm:$0xff] %vm501, %v1593
          %1722 = vrot.lane.b32.xlu0 %v1626, 1
          %v1723 = vpop.permute.xlu0 %1722
          %1724 = vrot.lane.b32.xlu0 %v1627, 1
          %v1725 = vpop.permute.xlu0 %1724
          %1726 = vrot.lane.b32.xlu0 %v1628, 1
          %v1727 = vpop.permute.xlu0 %1726
          %1728 = vrot.lane.b32.xlu0 %v1629, 1
          %v1729 = vpop.permute.xlu0 %1728
          %1730 = vrot.lane.b32.xlu0 %v1630, 1
          %v1731 = vpop.permute.xlu0 %1730
          %1732 = vrot.lane.b32.xlu0 %v1631, 1
          %v1733 = vpop.permute.xlu0 %1732
          %1734 = vrot.lane.b32.xlu0 %v1632, 1
          %v1735 = vpop.permute.xlu0 %1734
          %1736 = vrot.lane.b32.xlu0 %v1633, 1
          %v1737 = vpop.permute.xlu0 %1736
          %1738 = vrot.lane.b32.xlu0 %v1634, 1
          %v1739 = vpop.permute.xlu0 %1738
          %1740 = vrot.lane.b32.xlu0 %v1635, 1
          %v1741 = vpop.permute.xlu0 %1740
          %1742 = vrot.lane.b32.xlu0 %v1636, 1
          %v1743 = vpop.permute.xlu0 %1742
          %1744 = vrot.lane.b32.xlu0 %v1637, 1
          %v1745 = vpop.permute.xlu0 %1744
          %1746 = vrot.lane.b32.xlu0 %v1638, 1
          %v1747 = vpop.permute.xlu0 %1746
          %1748 = vrot.lane.b32.xlu0 %v1639, 1
          %v1749 = vpop.permute.xlu0 %1748
          %1750 = vrot.lane.b32.xlu0 %v1640, 1
          %v1751 = vpop.permute.xlu0 %1750
          %1752 = vrot.lane.b32.xlu0 %v1641, 1
          %v1753 = vpop.permute.xlu0 %1752
          %1754 = vrot.lane.b32.xlu0 %v1642, 1
          %v1755 = vpop.permute.xlu0 %1754
          %1756 = vrot.lane.b32.xlu0 %v1643, 1
          %v1757 = vpop.permute.xlu0 %1756
          %1758 = vrot.lane.b32.xlu0 %v1644, 1
          %v1759 = vpop.permute.xlu0 %1758
          %1760 = vrot.lane.b32.xlu0 %v1645, 1
          %v1761 = vpop.permute.xlu0 %1760
          %1762 = vrot.lane.b32.xlu0 %v1646, 1
          %v1763 = vpop.permute.xlu0 %1762
          %1764 = vrot.lane.b32.xlu0 %v1647, 1
          %v1765 = vpop.permute.xlu0 %1764
          %1766 = vrot.lane.b32.xlu0 %v1648, 1
          %v1767 = vpop.permute.xlu0 %1766
          %1768 = vrot.lane.b32.xlu0 %v1649, 1
          %v1769 = vpop.permute.xlu0 %1768
          %1770 = vrot.lane.b32.xlu0 %v1650, 1
          %v1771 = vpop.permute.xlu0 %1770
          %1772 = vrot.lane.b32.xlu0 %v1651, 1
          %v1773 = vpop.permute.xlu0 %1772
          %1774 = vrot.lane.b32.xlu0 %v1652, 1
          %v1775 = vpop.permute.xlu0 %1774
          %1776 = vrot.lane.b32.xlu0 %v1653, 1
          %v1777 = vpop.permute.xlu0 %1776
          %1778 = vrot.lane.b32.xlu0 %v1654, 1
          %v1779 = vpop.permute.xlu0 %1778
          %1780 = vrot.lane.b32.xlu0 %v1655, 1
          %v1781 = vpop.permute.xlu0 %1780
          %1782 = vrot.lane.b32.xlu0 %v1656, 1
          %v1783 = vpop.permute.xlu0 %1782
          %1784 = vrot.lane.b32.xlu0 %v1657, 1
          %v1785 = vpop.permute.xlu0 %1784
          %vm1818 = vcmask 15368
          %1819 = vst.msk [vmem:[%s207] sm:$0xff] %vm1818, %v1723
          %1820 = vst.msk [vmem:[%s207 + $0x8] sm:$0xff] %vm1818, %v1725
          %1821 = vst.msk [vmem:[%s207 + $0x10] sm:$0xff] %vm1818, %v1727
          %1822 = vst.msk [vmem:[%s207 + $0x18] sm:$0xff] %vm1818, %v1729
          %1823 = vst.msk [vmem:[%s207 + $0x20] sm:$0xff] %vm1818, %v1731
          %1824 = vst.msk [vmem:[%s207 + $0x28] sm:$0xff] %vm1818, %v1733
          %1825 = vst.msk [vmem:[%s207 + $0x30] sm:$0xff] %vm1818, %v1735
          %1826 = vst.msk [vmem:[%s207 + $0x38] sm:$0xff] %vm1818, %v1737
          %1827 = vst.msk [vmem:[%s207 + $0x40] sm:$0xff] %vm1818, %v1739
          %1828 = vst.msk [vmem:[%s207 + $0x48] sm:$0xff] %vm1818, %v1741
          %1829 = vst.msk [vmem:[%s207 + $0x50] sm:$0xff] %vm1818, %v1743
          %1830 = vst.msk [vmem:[%s207 + $0x58] sm:$0xff] %vm1818, %v1745
          %1831 = vst.msk [vmem:[%s207 + $0x60] sm:$0xff] %vm1818, %v1747
          %1832 = vst.msk [vmem:[%s207 + $0x68] sm:$0xff] %vm1818, %v1749
          %1833 = vst.msk [vmem:[%s207 + $0x70] sm:$0xff] %vm1818, %v1751
          %1834 = vst.msk [vmem:[%s207 + $0x78] sm:$0xff] %vm1818, %v1753
          %1835 = vst.msk [vmem:[%s207 + $0x80] sm:$0xff] %vm1818, %v1755
          %1836 = vst.msk [vmem:[%s207 + $0x88] sm:$0xff] %vm1818, %v1757
          %1837 = vst.msk [vmem:[%s207 + $0x90] sm:$0xff] %vm1818, %v1759
          %1838 = vst.msk [vmem:[%s207 + $0x98] sm:$0xff] %vm1818, %v1761
          %1839 = vst.msk [vmem:[%s207 + $0xa0] sm:$0xff] %vm1818, %v1763
          %1840 = vst.msk [vmem:[%s207 + $0xa8] sm:$0xff] %vm1818, %v1765
          %1841 = vst.msk [vmem:[%s207 + $0xb0] sm:$0xff] %vm1818, %v1767
          %1842 = vst.msk [vmem:[%s207 + $0xb8] sm:$0xff] %vm1818, %v1769
          %1843 = vst.msk [vmem:[%s207 + $0xc0] sm:$0xff] %vm1818, %v1771
          %1844 = vst.msk [vmem:[%s207 + $0xc8] sm:$0xff] %vm1818, %v1773
          %1845 = vst.msk [vmem:[%s207 + $0xd0] sm:$0xff] %vm1818, %v1775
          %1846 = vst.msk [vmem:[%s207 + $0xd8] sm:$0xff] %vm1818, %v1777
          %1847 = vst.msk [vmem:[%s207 + $0xe0] sm:$0xff] %vm1818, %v1779
          %1848 = vst.msk [vmem:[%s207 + $0xe8] sm:$0xff] %vm1818, %v1781
          %1849 = vst.msk [vmem:[%s207 + $0xf0] sm:$0xff] %vm1818, %v1783
          %1850 = vst.msk [vmem:[%s207 + $0xf8] sm:$0xff] %vm1818, %v1785
        $region44: #{tpu_custom_call.1} parent=31 // pred_fallthru
          _
        %p1851 = scmp.lt.s32.totalorder %s21, 1
        %s1852 = scalar_select %p1851, %s21, 1
        %s1853 = smul.addr %s1852, 32
        %s1854 = smul.addr %s1853, 8
        %s1855 = scalar_lea.vmem %s3, %s1854
        // Predicated region
        $region45: #{tpu_custom_call.1} parent=31 // pred_check
          %p1856 = pneg %p117
        $region46: #{tpu_custom_call.1} parent=31 // pred_check_branch
          %1858 = sbr.rel (%p1856) target = $region48
        $region47: #{tpu_custom_call.1} parent=31 // pred_region
          _
        $region48: #{tpu_custom_call.1} parent=31 // pred_fallthru
          _
      $region32: #{tpu_custom_call.1} parent=5 // pred_fallthru
        _
      %p1859 = scmp.le.s32.totalorder 2, %s12
      // Predicated region
      $region49: #{tpu_custom_call.1} parent=5 // pred_check
        %p1860 = pneg %p1859
      $region50: #{tpu_custom_call.1} parent=5 // pred_check_branch
        %1862 = sbr.rel (%p1860) target = $region52
      $region51: #{tpu_custom_call.1} parent=5 // pred_region
        %s1863 = ssub.s32 %s12, 2
        // Predicated region
        $region53: #{tpu_custom_call.1} parent=51 // pred_check
          %p1864 = pneg %p123
        $region54: #{tpu_custom_call.1} parent=51 // pred_check_branch
          %1866 = sbr.rel (%p1864) target = $region56
        $region55: #{tpu_custom_call.1} parent=51 // pred_region
          %p1867 = scmp.lt.s32.totalorder %s23, 1
          %s1868 = scalar_select %p1867, %s23, 1
          %s1869 = smul.addr %s1868, 32
          %s1870 = smul.addr %s1869, 8
          %s1871 = scalar_lea.vmem %s3, %s1870
        $region56: #{tpu_custom_call.1} parent=51 // pred_fallthru
          _
      $region52: #{tpu_custom_call.1} parent=5 // pred_fallthru
        _
    $region6: #{tpu_custom_call.1} parent=1 // loop_footer
      %s16 = sadd.s32 1, %s12
    $region7: #{tpu_custom_call.1} parent=1 // loop_footer_branch
      %11 = sbr.rel target = $region3
    $region8: #{tpu_custom_call.1} parent=1 // loop_exit
      _
    %1872 = vsyncpa [#allocation5], 1
    %s1873 = scalar_lea.sflag [#allocation5], 1
    %1874 = vsyncpa %s1873, 1

</llo_original>
